<compile_context>
chip_gen: v6e
topology: v6e:2x2x1
jax: 0.10.0
libtpu: 0.0.40
codegen_flags: <defaults>
</compile_context>

<pallas_src>
import functools

import jax
import jax.numpy as jnp
from jax.experimental import pallas as pl
from jax.experimental.pallas import tpu as pltpu


def _drnn_kernel(x2d_ref,               # [B*T, E]   bf16 (rows ordered b*T + t)
                 wih1_ref,              # [E,  H1]   bf16
                 whh1_ref,              # [H1, H1]   bf16
                 b1_ref,                # [1,  H1]   f32  (b_ih + b_hh)
                 w2cat_ref,             # [2*H1, H2] bf16 ([Wih2; Whh2])
                 b2_ref,                # [1,  H2]   f32
                 wl1_ref, bl1_ref,      # [H1, O1] bf16, [1, O1] f32
                 wl2_ref, bl2_ref,      # [H2, O2] bf16, [1, O2] f32
                 y_ref,                 # [T*B, O1]  f32  (rows ordered t*B + b)
                 z_ref,                 # [T*B, O2]  f32
                 h1_all_ref,            # scratch VMEM [T*B, H1] f32
                 h2_all_ref,            # scratch VMEM [T*B, H2] f32
                 *, B, T):
    H1 = whh1_ref.shape[0]
    H2 = b2_ref.shape[1]

    # ---- Hoisted input projection: one big MXU call, off the recurrence ----
    xproj = (jnp.dot(x2d_ref[...], wih1_ref[...],
                     preferred_element_type=jnp.float32)
             + b1_ref[...])                                   # f32 [B*T, H1]
    xproj = xproj.reshape(B, T, H1)                           # batch-major view

    # Only the tiny recurrent weights stay live across the (unrolled) loop.
    whh1 = whh1_ref[...]                                      # bf16 [H1, H1]
    w2cat = w2cat_ref[...]                                    # bf16 [2*H1, H2]
    b2 = b2_ref[...]                                          # f32  [1, H2]

    h1 = jnp.zeros((B, H1), jnp.float32)
    h2 = jnp.zeros((B, H2), jnp.float32)

    # Fully unrolled time loop (T static & small): only two tiny matmuls + tanh
    # per step remain on the serial critical path.
    for t in range(T):
        # RNN1: h1_t = tanh(x_t @ Wih1 + b1 + h1_{t-1} @ Whh1)
        h1 = jnp.tanh(xproj[:, t, :]
                      + jnp.dot(h1.astype(whh1.dtype), whh1,
                                preferred_element_type=jnp.float32))
        # RNN2 (fused): h2_t = tanh([h1_t, h2_{t-1}] @ [Wih2; Whh2] + b2)
        h12 = jnp.concatenate([h1, h2], axis=-1).astype(w2cat.dtype)
        h2 = jnp.tanh(jnp.dot(h12, w2cat,
                              preferred_element_type=jnp.float32) + b2)
        # Stash states (time-major rows) for the post-loop output heads.
        h1_all_ref[pl.ds(t * B, B), :] = h1
        h2_all_ref[pl.ds(t * B, B), :] = h2

    # ---- Output heads: two batched matmuls + one store each, off the loop ----
    y_ref[...] = (jnp.dot(h1_all_ref[...].astype(wl1_ref.dtype), wl1_ref[...],
                          preferred_element_type=jnp.float32) + bl1_ref[...])
    z_ref[...] = (jnp.dot(h2_all_ref[...].astype(wl2_ref.dtype), wl2_ref[...],
                          preferred_element_type=jnp.float32) + bl2_ref[...])


@jax.jit
def drnn_bert_forward(x, params):
    """x: [B, T, 768] float32 (precomputed BERT embeddings). Returns (y, z)."""
    wih1, whh1, b1, wih2, whh2, b2, wl1, bl1, wl2, bl2 = params
    B, T, E = x.shape
    H1 = whh1.shape[0]
    H2 = whh2.shape[0]
    O1 = wl1.shape[1]
    O2 = wl2.shape[1]

    bf16 = jnp.bfloat16
    # bf16 matmul operands (f32 accumulation inside the kernel). x stays
    # batch-first; flattening [B,T,E] -> [B*T,E] is a free reshape (no big
    # transpose of the embedding tensor).
    x2d = x.astype(bf16).reshape(B * T, E)
    w2cat = jnp.concatenate([wih2, whh2], axis=0).astype(bf16)   # [2*H1, H2]

    vmem = pl.BlockSpec(memory_space=pltpu.MemorySpace.VMEM)
    y_flat, z_flat = pl.pallas_call(
        functools.partial(_drnn_kernel, B=B, T=T),
        out_shape=(
            jax.ShapeDtypeStruct((T * B, O1), jnp.float32),
            jax.ShapeDtypeStruct((T * B, O2), jnp.float32),
        ),
        in_specs=[vmem] * 10,
        out_specs=(vmem, vmem),
        scratch_shapes=[
            pltpu.VMEM((T * B, H1), jnp.float32),
            pltpu.VMEM((T * B, H2), jnp.float32),
        ],
        compiler_params=pltpu.CompilerParams(
            # Explicit limit: stays within every generation's scoped VMEM and
            # covers v5e's smaller 16 MiB default if shapes are scaled up
            # (toy sizes here use well under 1 MiB).
            vmem_limit_bytes=32 * 1024 * 1024,
        ),
    )(x2d,
      wih1.astype(bf16), whh1.astype(bf16), b1,
      w2cat, b2,
      wl1.astype(bf16), bl1,
      wl2.astype(bf16), bl2)

    # Only the small head outputs get reordered back to batch_first [B, T, O].
    y = jnp.transpose(y_flat.reshape(T, B, O1), (1, 0, 2))
    z = jnp.transpose(z_flat.reshape(T, B, O2), (1, 0, 2))
    return y, z


def init_params(key, E, H1, H2, O1, O2):
    """Deterministic parameter init (shapes follow torch nn.RNN / nn.Linear)."""
    ks = jax.random.split(key, 10)

    def unif(k, shape, bound):
        return jax.random.uniform(k, shape, jnp.float32, -bound, bound)

    k1 = 1.0 / jnp.sqrt(H1)
    k2 = 1.0 / jnp.sqrt(H2)
    # RNN weights stored pre-transposed ([in, out]) for x @ W matmuls.
    wih1 = unif(ks[0], (E, H1), k1)
    whh1 = unif(ks[1], (H1, H1), k1)
    b1 = unif(ks[2], (1, H1), k1) + unif(ks[3], (1, H1), k1)   # b_ih + b_hh
    wih2 = unif(ks[4], (H1, H2), k2)
    whh2 = unif(ks[5], (H2, H2), k2)
    b2 = unif(ks[6], (1, H2), k2) + unif(ks[7], (1, H2), k2)
    # Linear heads ([in, out]).
    kl1 = 1.0 / jnp.sqrt(H1)
    kl2 = 1.0 / jnp.sqrt(H2)
    wl1 = unif(ks[8], (H1, O1), kl1)
    bl1 = unif(jax.random.fold_in(ks[8], 1), (1, O1), kl1)
    wl2 = unif(ks[9], (H2, O2), kl2)
    bl2 = unif(jax.random.fold_in(ks[9], 1), (1, O2), kl2)
    return (wih1, whh1, b1, wih2, whh2, b2, wl1, bl1, wl2, bl2)


def reference_forward(x, params):
    """Pure-JAX f32 reference of the same forward pass (full precision dots)."""
    wih1, whh1, b1, wih2, whh2, b2, wl1, bl1, wl2, bl2 = params
    hp = jax.lax.Precision.HIGHEST
    B, T, _ = x.shape
    h1 = jnp.zeros((B, whh1.shape[0]), jnp.float32)
    h2 = jnp.zeros((B, whh2.shape[0]), jnp.float32)
    ys, zs = [], []
    for t in range(T):
        h1 = jnp.tanh(jnp.dot(x[:, t], wih1, precision=hp)
                      + jnp.dot(h1, whh1, precision=hp) + b1)
        h2 = jnp.tanh(jnp.dot(h1, wih2, precision=hp)
                      + jnp.dot(h2, whh2, precision=hp) + b2)
        ys.append(jnp.dot(h1, wl1, precision=hp) + bl1)
        zs.append(jnp.dot(h2, wl2, precision=hp) + bl2)
    return jnp.stack(ys, axis=1), jnp.stack(zs, axis=1)


if __name__ == "__main__":
    # Module hyper-params. forward() implies inputsize == hiddensize1 and
    # inchanle == hiddensize1 == hiddensize2 for shapes to be consistent.
    B, T, E = 2, 8, 768          # batchsize, seq len, BERT hidden
    H1 = H2 = 32                 # hiddensize1 = hiddensize2 = inputsize = inchanle
    O1, O2 = 16, 8               # outchanle1, outchanle2

    key = jax.random.PRNGKey(0)
    kx, kp = jax.random.split(key)
    x = jax.random.normal(kx, (B, T, E), jnp.float32)   # stands in for Embw output
    params = init_params(kp, E, H1, H2, O1, O2)

    y, z = drnn_bert_forward(x, params)
    jax.block_until_ready((y, z))

    y_ref, z_ref = reference_forward(x, params)
    assert y.shape == (B, T, O1) and z.shape == (B, T, O2)
    # Tolerance accounts for bf16 MXU operands (f32 accumulation) vs f32 reference.
    assert jnp.allclose(y, y_ref, atol=3e-2, rtol=3e-2), "y mismatch vs reference"
    assert jnp.allclose(z, z_ref, atol=3e-2, rtol=3e-2), "z mismatch vs reference"

    print("KERNEL_OK")
</pallas_src>

<mosaic_0001>
module attributes {stable_mosaic.version = 11 : i64} {
  func.func @_drnn_kernel(%arg0: memref<16x768xbf16, #tpu.memory_space<vmem>>, %arg1: memref<768x32xbf16, #tpu.memory_space<vmem>>, %arg2: memref<32x32xbf16, #tpu.memory_space<vmem>>, %arg3: memref<1x32xf32, #tpu.memory_space<vmem>>, %arg4: memref<64x32xbf16, #tpu.memory_space<vmem>>, %arg5: memref<1x32xf32, #tpu.memory_space<vmem>>, %arg6: memref<32x16xbf16, #tpu.memory_space<vmem>>, %arg7: memref<1x16xf32, #tpu.memory_space<vmem>>, %arg8: memref<32x8xbf16, #tpu.memory_space<vmem>>, %arg9: memref<1x8xf32, #tpu.memory_space<vmem>>, %arg10: memref<16x16xf32, #tpu.memory_space<vmem>>, %arg11: memref<16x8xf32, #tpu.memory_space<vmem>>, %arg12: memref<16x32xf32, #tpu.memory_space<vmem>>, %arg13: memref<16x32xf32, #tpu.memory_space<vmem>>) attributes {dimension_semantics = [], scalar_prefetch = 0 : i64, scratch_operands = 2 : i64, tpu.core_type = #tpu.core_type<tc>} {
    %c0 = arith.constant 0 : index
    %c0_0 = arith.constant 0 : index
    %0 = vector.load %arg0[%c0, %c0_0] : memref<16x768xbf16, #tpu.memory_space<vmem>>, vector<16x768xbf16>
    %c0_1 = arith.constant 0 : index
    %c0_2 = arith.constant 0 : index
    %1 = vector.load %arg1[%c0_1, %c0_2] : memref<768x32xbf16, #tpu.memory_space<vmem>>, vector<768x32xbf16>
    %cst = arith.constant dense<0.000000e+00> : vector<16x32xf32>
    %2 = tpu.matmul %0, %1, %cst {dimension_numbers = #tpu.dot_dimension_numbers<[1], [0], [0], [1], [0, 0, 1, 1], [], []>} : vector<16x768xbf16>, vector<768x32xbf16>, vector<16x32xf32> -> vector<16x32xf32>
    %c0_3 = arith.constant 0 : index
    %c0_4 = arith.constant 0 : index
    %3 = vector.load %arg3[%c0_3, %c0_4] : memref<1x32xf32, #tpu.memory_space<vmem>>, vector<1x32xf32>
    %4 = vector.broadcast %3 : vector<1x32xf32> to vector<16x32xf32>
    %5 = arith.addf %2, %4 : vector<16x32xf32>
    %6 = vector.shape_cast %5 : vector<16x32xf32> to vector<2x8x32xf32>
    %c0_5 = arith.constant 0 : index
    %c0_6 = arith.constant 0 : index
    %7 = vector.load %arg2[%c0_5, %c0_6] : memref<32x32xbf16, #tpu.memory_space<vmem>>, vector<32x32xbf16>
    %c0_7 = arith.constant 0 : index
    %c0_8 = arith.constant 0 : index
    %8 = vector.load %arg4[%c0_7, %c0_8] : memref<64x32xbf16, #tpu.memory_space<vmem>>, vector<64x32xbf16>
    %c0_9 = arith.constant 0 : index
    %c0_10 = arith.constant 0 : index
    %9 = vector.load %arg5[%c0_9, %c0_10] : memref<1x32xf32, #tpu.memory_space<vmem>>, vector<1x32xf32>
    %cst_11 = arith.constant 0.000000e+00 : f32
    %10 = vector.broadcast %cst_11 : f32 to vector<2x32xf32>
    %cst_12 = arith.constant 0.000000e+00 : f32
    %11 = vector.broadcast %cst_12 : f32 to vector<2x32xf32>
    %12 = vector.extract_strided_slice %6 {offsets = [0, 0, 0], sizes = [2, 1, 32], strides = [1, 1, 1]} : vector<2x8x32xf32> to vector<2x1x32xf32>
    %13 = vector.shape_cast %12 : vector<2x1x32xf32> to vector<2x32xf32>
    %14 = arith.truncf %10 : vector<2x32xf32> to vector<2x32xbf16>
    %cst_13 = arith.constant dense<0.000000e+00> : vector<2x32xf32>
    %15 = tpu.matmul %14, %7, %cst_13 {dimension_numbers = #tpu.dot_dimension_numbers<[1], [0], [0], [1], [0, 0, 1, 1], [], []>} : vector<2x32xbf16>, vector<32x32xbf16>, vector<2x32xf32> -> vector<2x32xf32>
    %16 = arith.addf %13, %15 : vector<2x32xf32>
    %17 = math.tanh %16 : vector<2x32xf32>
    %18 = tpu.concatenate %17, %11 in 1 : vector<2x32xf32>, vector<2x32xf32> -> vector<2x64xf32>
    %19 = arith.truncf %18 : vector<2x64xf32> to vector<2x64xbf16>
    %cst_14 = arith.constant dense<0.000000e+00> : vector<2x32xf32>
    %20 = tpu.matmul %19, %8, %cst_14 {dimension_numbers = #tpu.dot_dimension_numbers<[1], [0], [0], [1], [0, 0, 1, 1], [], []>} : vector<2x64xbf16>, vector<64x32xbf16>, vector<2x32xf32> -> vector<2x32xf32>
    %21 = vector.broadcast %9 : vector<1x32xf32> to vector<2x32xf32>
    %22 = arith.addf %20, %21 : vector<2x32xf32>
    %23 = math.tanh %22 : vector<2x32xf32>
    %c0_15 = arith.constant 0 : index
    %c0_16 = arith.constant 0 : index
    %24 = vector.load %arg12[%c0_15, %c0_16] : memref<16x32xf32, #tpu.memory_space<vmem>>, vector<2x32xf32>
    tpu.vector_store %arg12[%c0_15, %c0_16], %17 {strides = array<i32>} : memref<16x32xf32, #tpu.memory_space<vmem>>, vector<2x32xf32>,
    %c0_17 = arith.constant 0 : index
    %c0_18 = arith.constant 0 : index
    %25 = vector.load %arg13[%c0_17, %c0_18] : memref<16x32xf32, #tpu.memory_space<vmem>>, vector<2x32xf32>
    tpu.vector_store %arg13[%c0_17, %c0_18], %23 {strides = array<i32>} : memref<16x32xf32, #tpu.memory_space<vmem>>, vector<2x32xf32>,
    %26 = vector.extract_strided_slice %6 {offsets = [0, 1, 0], sizes = [2, 1, 32], strides = [1, 1, 1]} : vector<2x8x32xf32> to vector<2x1x32xf32>
    %27 = vector.shape_cast %26 : vector<2x1x32xf32> to vector<2x32xf32>
    %28 = arith.truncf %17 : vector<2x32xf32> to vector<2x32xbf16>
    %cst_19 = arith.constant dense<0.000000e+00> : vector<2x32xf32>
    %29 = tpu.matmul %28, %7, %cst_19 {dimension_numbers = #tpu.dot_dimension_numbers<[1], [0], [0], [1], [0, 0, 1, 1], [], []>} : vector<2x32xbf16>, vector<32x32xbf16>, vector<2x32xf32> -> vector<2x32xf32>
    %30 = arith.addf %27, %29 : vector<2x32xf32>
    %31 = math.tanh %30 : vector<2x32xf32>
    %32 = tpu.concatenate %31, %23 in 1 : vector<2x32xf32>, vector<2x32xf32> -> vector<2x64xf32>
    %33 = arith.truncf %32 : vector<2x64xf32> to vector<2x64xbf16>
    %cst_20 = arith.constant dense<0.000000e+00> : vector<2x32xf32>
    %34 = tpu.matmul %33, %8, %cst_20 {dimension_numbers = #tpu.dot_dimension_numbers<[1], [0], [0], [1], [0, 0, 1, 1], [], []>} : vector<2x64xbf16>, vector<64x32xbf16>, vector<2x32xf32> -> vector<2x32xf32>
    %35 = vector.broadcast %9 : vector<1x32xf32> to vector<2x32xf32>
    %36 = arith.addf %34, %35 : vector<2x32xf32>
    %37 = math.tanh %36 : vector<2x32xf32>
    %c2 = arith.constant 2 : index
    %c0_21 = arith.constant 0 : index
    %38 = vector.load %arg12[%c2, %c0_21] : memref<16x32xf32, #tpu.memory_space<vmem>>, vector<2x32xf32>
    tpu.vector_store %arg12[%c2, %c0_21], %31 {strides = array<i32>} : memref<16x32xf32, #tpu.memory_space<vmem>>, vector<2x32xf32>,
    %c2_22 = arith.constant 2 : index
    %c0_23 = arith.constant 0 : index
    %39 = vector.load %arg13[%c2_22, %c0_23] : memref<16x32xf32, #tpu.memory_space<vmem>>, vector<2x32xf32>
    tpu.vector_store %arg13[%c2_22, %c0_23], %37 {strides = array<i32>} : memref<16x32xf32, #tpu.memory_space<vmem>>, vector<2x32xf32>,
    %40 = vector.extract_strided_slice %6 {offsets = [0, 2, 0], sizes = [2, 1, 32], strides = [1, 1, 1]} : vector<2x8x32xf32> to vector<2x1x32xf32>
    %41 = vector.shape_cast %40 : vector<2x1x32xf32> to vector<2x32xf32>
    %42 = arith.truncf %31 : vector<2x32xf32> to vector<2x32xbf16>
    %cst_24 = arith.constant dense<0.000000e+00> : vector<2x32xf32>
    %43 = tpu.matmul %42, %7, %cst_24 {dimension_numbers = #tpu.dot_dimension_numbers<[1], [0], [0], [1], [0, 0, 1, 1], [], []>} : vector<2x32xbf16>, vector<32x32xbf16>, vector<2x32xf32> -> vector<2x32xf32>
    %44 = arith.addf %41, %43 : vector<2x32xf32>
    %45 = math.tanh %44 : vector<2x32xf32>
    %46 = tpu.concatenate %45, %37 in 1 : vector<2x32xf32>, vector<2x32xf32> -> vector<2x64xf32>
    %47 = arith.truncf %46 : vector<2x64xf32> to vector<2x64xbf16>
    %cst_25 = arith.constant dense<0.000000e+00> : vector<2x32xf32>
    %48 = tpu.matmul %47, %8, %cst_25 {dimension_numbers = #tpu.dot_dimension_numbers<[1], [0], [0], [1], [0, 0, 1, 1], [], []>} : vector<2x64xbf16>, vector<64x32xbf16>, vector<2x32xf32> -> vector<2x32xf32>
    %49 = vector.broadcast %9 : vector<1x32xf32> to vector<2x32xf32>
    %50 = arith.addf %48, %49 : vector<2x32xf32>
    %51 = math.tanh %50 : vector<2x32xf32>
    %c4 = arith.constant 4 : index
    %c0_26 = arith.constant 0 : index
    %52 = vector.load %arg12[%c4, %c0_26] : memref<16x32xf32, #tpu.memory_space<vmem>>, vector<2x32xf32>
    tpu.vector_store %arg12[%c4, %c0_26], %45 {strides = array<i32>} : memref<16x32xf32, #tpu.memory_space<vmem>>, vector<2x32xf32>,
    %c4_27 = arith.constant 4 : index
    %c0_28 = arith.constant 0 : index
    %53 = vector.load %arg13[%c4_27, %c0_28] : memref<16x32xf32, #tpu.memory_space<vmem>>, vector<2x32xf32>
    tpu.vector_store %arg13[%c4_27, %c0_28], %51 {strides = array<i32>} : memref<16x32xf32, #tpu.memory_space<vmem>>, vector<2x32xf32>,
    %54 = vector.extract_strided_slice %6 {offsets = [0, 3, 0], sizes = [2, 1, 32], strides = [1, 1, 1]} : vector<2x8x32xf32> to vector<2x1x32xf32>
    %55 = vector.shape_cast %54 : vector<2x1x32xf32> to vector<2x32xf32>
    %56 = arith.truncf %45 : vector<2x32xf32> to vector<2x32xbf16>
    %cst_29 = arith.constant dense<0.000000e+00> : vector<2x32xf32>
    %57 = tpu.matmul %56, %7, %cst_29 {dimension_numbers = #tpu.dot_dimension_numbers<[1], [0], [0], [1], [0, 0, 1, 1], [], []>} : vector<2x32xbf16>, vector<32x32xbf16>, vector<2x32xf32> -> vector<2x32xf32>
    %58 = arith.addf %55, %57 : vector<2x32xf32>
    %59 = math.tanh %58 : vector<2x32xf32>
    %60 = tpu.concatenate %59, %51 in 1 : vector<2x32xf32>, vector<2x32xf32> -> vector<2x64xf32>
    %61 = arith.truncf %60 : vector<2x64xf32> to vector<2x64xbf16>
    %cst_30 = arith.constant dense<0.000000e+00> : vector<2x32xf32>
    %62 = tpu.matmul %61, %8, %cst_30 {dimension_numbers = #tpu.dot_dimension_numbers<[1], [0], [0], [1], [0, 0, 1, 1], [], []>} : vector<2x64xbf16>, vector<64x32xbf16>, vector<2x32xf32> -> vector<2x32xf32>
    %63 = vector.broadcast %9 : vector<1x32xf32> to vector<2x32xf32>
    %64 = arith.addf %62, %63 : vector<2x32xf32>
    %65 = math.tanh %64 : vector<2x32xf32>
    %c6 = arith.constant 6 : index
    %c0_31 = arith.constant 0 : index
    %66 = vector.load %arg12[%c6, %c0_31] : memref<16x32xf32, #tpu.memory_space<vmem>>, vector<2x32xf32>
    tpu.vector_store %arg12[%c6, %c0_31], %59 {strides = array<i32>} : memref<16x32xf32, #tpu.memory_space<vmem>>, vector<2x32xf32>,
    %c6_32 = arith.constant 6 : index
    %c0_33 = arith.constant 0 : index
    %67 = vector.load %arg13[%c6_32, %c0_33] : memref<16x32xf32, #tpu.memory_space<vmem>>, vector<2x32xf32>
    tpu.vector_store %arg13[%c6_32, %c0_33], %65 {strides = array<i32>} : memref<16x32xf32, #tpu.memory_space<vmem>>, vector<2x32xf32>,
    %68 = vector.extract_strided_slice %6 {offsets = [0, 4, 0], sizes = [2, 1, 32], strides = [1, 1, 1]} : vector<2x8x32xf32> to vector<2x1x32xf32>
    %69 = vector.shape_cast %68 : vector<2x1x32xf32> to vector<2x32xf32>
    %70 = arith.truncf %59 : vector<2x32xf32> to vector<2x32xbf16>
    %cst_34 = arith.constant dense<0.000000e+00> : vector<2x32xf32>
    %71 = tpu.matmul %70, %7, %cst_34 {dimension_numbers = #tpu.dot_dimension_numbers<[1], [0], [0], [1], [0, 0, 1, 1], [], []>} : vector<2x32xbf16>, vector<32x32xbf16>, vector<2x32xf32> -> vector<2x32xf32>
    %72 = arith.addf %69, %71 : vector<2x32xf32>
    %73 = math.tanh %72 : vector<2x32xf32>
    %74 = tpu.concatenate %73, %65 in 1 : vector<2x32xf32>, vector<2x32xf32> -> vector<2x64xf32>
    %75 = arith.truncf %74 : vector<2x64xf32> to vector<2x64xbf16>
    %cst_35 = arith.constant dense<0.000000e+00> : vector<2x32xf32>
    %76 = tpu.matmul %75, %8, %cst_35 {dimension_numbers = #tpu.dot_dimension_numbers<[1], [0], [0], [1], [0, 0, 1, 1], [], []>} : vector<2x64xbf16>, vector<64x32xbf16>, vector<2x32xf32> -> vector<2x32xf32>
    %77 = vector.broadcast %9 : vector<1x32xf32> to vector<2x32xf32>
    %78 = arith.addf %76, %77 : vector<2x32xf32>
    %79 = math.tanh %78 : vector<2x32xf32>
    %c8 = arith.constant 8 : index
    %c0_36 = arith.constant 0 : index
    %80 = vector.load %arg12[%c8, %c0_36] : memref<16x32xf32, #tpu.memory_space<vmem>>, vector<2x32xf32>
    tpu.vector_store %arg12[%c8, %c0_36], %73 {strides = array<i32>} : memref<16x32xf32, #tpu.memory_space<vmem>>, vector<2x32xf32>,
    %c8_37 = arith.constant 8 : index
    %c0_38 = arith.constant 0 : index
    %81 = vector.load %arg13[%c8_37, %c0_38] : memref<16x32xf32, #tpu.memory_space<vmem>>, vector<2x32xf32>
    tpu.vector_store %arg13[%c8_37, %c0_38], %79 {strides = array<i32>} : memref<16x32xf32, #tpu.memory_space<vmem>>, vector<2x32xf32>,
    %82 = vector.extract_strided_slice %6 {offsets = [0, 5, 0], sizes = [2, 1, 32], strides = [1, 1, 1]} : vector<2x8x32xf32> to vector<2x1x32xf32>
    %83 = vector.shape_cast %82 : vector<2x1x32xf32> to vector<2x32xf32>
    %84 = arith.truncf %73 : vector<2x32xf32> to vector<2x32xbf16>
    %cst_39 = arith.constant dense<0.000000e+00> : vector<2x32xf32>
    %85 = tpu.matmul %84, %7, %cst_39 {dimension_numbers = #tpu.dot_dimension_numbers<[1], [0], [0], [1], [0, 0, 1, 1], [], []>} : vector<2x32xbf16>, vector<32x32xbf16>, vector<2x32xf32> -> vector<2x32xf32>
    %86 = arith.addf %83, %85 : vector<2x32xf32>
    %87 = math.tanh %86 : vector<2x32xf32>
    %88 = tpu.concatenate %87, %79 in 1 : vector<2x32xf32>, vector<2x32xf32> -> vector<2x64xf32>
    %89 = arith.truncf %88 : vector<2x64xf32> to vector<2x64xbf16>
    %cst_40 = arith.constant dense<0.000000e+00> : vector<2x32xf32>
    %90 = tpu.matmul %89, %8, %cst_40 {dimension_numbers = #tpu.dot_dimension_numbers<[1], [0], [0], [1], [0, 0, 1, 1], [], []>} : vector<2x64xbf16>, vector<64x32xbf16>, vector<2x32xf32> -> vector<2x32xf32>
    %91 = vector.broadcast %9 : vector<1x32xf32> to vector<2x32xf32>
    %92 = arith.addf %90, %91 : vector<2x32xf32>
    %93 = math.tanh %92 : vector<2x32xf32>
    %c10 = arith.constant 10 : index
    %c0_41 = arith.constant 0 : index
    %94 = vector.load %arg12[%c10, %c0_41] : memref<16x32xf32, #tpu.memory_space<vmem>>, vector<2x32xf32>
    tpu.vector_store %arg12[%c10, %c0_41], %87 {strides = array<i32>} : memref<16x32xf32, #tpu.memory_space<vmem>>, vector<2x32xf32>,
    %c10_42 = arith.constant 10 : index
    %c0_43 = arith.constant 0 : index
    %95 = vector.load %arg13[%c10_42, %c0_43] : memref<16x32xf32, #tpu.memory_space<vmem>>, vector<2x32xf32>
    tpu.vector_store %arg13[%c10_42, %c0_43], %93 {strides = array<i32>} : memref<16x32xf32, #tpu.memory_space<vmem>>, vector<2x32xf32>,
    %96 = vector.extract_strided_slice %6 {offsets = [0, 6, 0], sizes = [2, 1, 32], strides = [1, 1, 1]} : vector<2x8x32xf32> to vector<2x1x32xf32>
    %97 = vector.shape_cast %96 : vector<2x1x32xf32> to vector<2x32xf32>
    %98 = arith.truncf %87 : vector<2x32xf32> to vector<2x32xbf16>
    %cst_44 = arith.constant dense<0.000000e+00> : vector<2x32xf32>
    %99 = tpu.matmul %98, %7, %cst_44 {dimension_numbers = #tpu.dot_dimension_numbers<[1], [0], [0], [1], [0, 0, 1, 1], [], []>} : vector<2x32xbf16>, vector<32x32xbf16>, vector<2x32xf32> -> vector<2x32xf32>
    %100 = arith.addf %97, %99 : vector<2x32xf32>
    %101 = math.tanh %100 : vector<2x32xf32>
    %102 = tpu.concatenate %101, %93 in 1 : vector<2x32xf32>, vector<2x32xf32> -> vector<2x64xf32>
    %103 = arith.truncf %102 : vector<2x64xf32> to vector<2x64xbf16>
    %cst_45 = arith.constant dense<0.000000e+00> : vector<2x32xf32>
    %104 = tpu.matmul %103, %8, %cst_45 {dimension_numbers = #tpu.dot_dimension_numbers<[1], [0], [0], [1], [0, 0, 1, 1], [], []>} : vector<2x64xbf16>, vector<64x32xbf16>, vector<2x32xf32> -> vector<2x32xf32>
    %105 = vector.broadcast %9 : vector<1x32xf32> to vector<2x32xf32>
    %106 = arith.addf %104, %105 : vector<2x32xf32>
    %107 = math.tanh %106 : vector<2x32xf32>
    %c12 = arith.constant 12 : index
    %c0_46 = arith.constant 0 : index
    %108 = vector.load %arg12[%c12, %c0_46] : memref<16x32xf32, #tpu.memory_space<vmem>>, vector<2x32xf32>
    tpu.vector_store %arg12[%c12, %c0_46], %101 {strides = array<i32>} : memref<16x32xf32, #tpu.memory_space<vmem>>, vector<2x32xf32>,
    %c12_47 = arith.constant 12 : index
    %c0_48 = arith.constant 0 : index
    %109 = vector.load %arg13[%c12_47, %c0_48] : memref<16x32xf32, #tpu.memory_space<vmem>>, vector<2x32xf32>
    tpu.vector_store %arg13[%c12_47, %c0_48], %107 {strides = array<i32>} : memref<16x32xf32, #tpu.memory_space<vmem>>, vector<2x32xf32>,
    %110 = vector.extract_strided_slice %6 {offsets = [0, 7, 0], sizes = [2, 1, 32], strides = [1, 1, 1]} : vector<2x8x32xf32> to vector<2x1x32xf32>
    %111 = vector.shape_cast %110 : vector<2x1x32xf32> to vector<2x32xf32>
    %112 = arith.truncf %101 : vector<2x32xf32> to vector<2x32xbf16>
    %cst_49 = arith.constant dense<0.000000e+00> : vector<2x32xf32>
    %113 = tpu.matmul %112, %7, %cst_49 {dimension_numbers = #tpu.dot_dimension_numbers<[1], [0], [0], [1], [0, 0, 1, 1], [], []>} : vector<2x32xbf16>, vector<32x32xbf16>, vector<2x32xf32> -> vector<2x32xf32>
    %114 = arith.addf %111, %113 : vector<2x32xf32>
    %115 = math.tanh %114 : vector<2x32xf32>
    %116 = tpu.concatenate %115, %107 in 1 : vector<2x32xf32>, vector<2x32xf32> -> vector<2x64xf32>
    %117 = arith.truncf %116 : vector<2x64xf32> to vector<2x64xbf16>
    %cst_50 = arith.constant dense<0.000000e+00> : vector<2x32xf32>
    %118 = tpu.matmul %117, %8, %cst_50 {dimension_numbers = #tpu.dot_dimension_numbers<[1], [0], [0], [1], [0, 0, 1, 1], [], []>} : vector<2x64xbf16>, vector<64x32xbf16>, vector<2x32xf32> -> vector<2x32xf32>
    %119 = vector.broadcast %9 : vector<1x32xf32> to vector<2x32xf32>
    %120 = arith.addf %118, %119 : vector<2x32xf32>
    %121 = math.tanh %120 : vector<2x32xf32>
    %c14 = arith.constant 14 : index
    %c0_51 = arith.constant 0 : index
    %122 = vector.load %arg12[%c14, %c0_51] : memref<16x32xf32, #tpu.memory_space<vmem>>, vector<2x32xf32>
    tpu.vector_store %arg12[%c14, %c0_51], %115 {strides = array<i32>} : memref<16x32xf32, #tpu.memory_space<vmem>>, vector<2x32xf32>,
    %c14_52 = arith.constant 14 : index
    %c0_53 = arith.constant 0 : index
    %123 = vector.load %arg13[%c14_52, %c0_53] : memref<16x32xf32, #tpu.memory_space<vmem>>, vector<2x32xf32>
    tpu.vector_store %arg13[%c14_52, %c0_53], %121 {strides = array<i32>} : memref<16x32xf32, #tpu.memory_space<vmem>>, vector<2x32xf32>,
    %c0_54 = arith.constant 0 : index
    %c0_55 = arith.constant 0 : index
    %124 = vector.load %arg12[%c0_54, %c0_55] : memref<16x32xf32, #tpu.memory_space<vmem>>, vector<16x32xf32>
    %125 = arith.truncf %124 : vector<16x32xf32> to vector<16x32xbf16>
    %c0_56 = arith.constant 0 : index
    %c0_57 = arith.constant 0 : index
    %126 = vector.load %arg6[%c0_56, %c0_57] : memref<32x16xbf16, #tpu.memory_space<vmem>>, vector<32x16xbf16>
    %cst_58 = arith.constant dense<0.000000e+00> : vector<16x16xf32>
    %127 = tpu.matmul %125, %126, %cst_58 {dimension_numbers = #tpu.dot_dimension_numbers<[1], [0], [0], [1], [0, 0, 1, 1], [], []>} : vector<16x32xbf16>, vector<32x16xbf16>, vector<16x16xf32> -> vector<16x16xf32>
    %c0_59 = arith.constant 0 : index
    %c0_60 = arith.constant 0 : index
    %128 = vector.load %arg7[%c0_59, %c0_60] : memref<1x16xf32, #tpu.memory_space<vmem>>, vector<1x16xf32>
    %129 = vector.broadcast %128 : vector<1x16xf32> to vector<16x16xf32>
    %130 = arith.addf %127, %129 : vector<16x16xf32>
    %c0_61 = arith.constant 0 : index
    %c0_62 = arith.constant 0 : index
    %131 = vector.load %arg10[%c0_61, %c0_62] : memref<16x16xf32, #tpu.memory_space<vmem>>, vector<16x16xf32>
    tpu.vector_store %arg10[%c0_61, %c0_62], %130 {strides = array<i32>} : memref<16x16xf32, #tpu.memory_space<vmem>>, vector<16x16xf32>,
    %c0_63 = arith.constant 0 : index
    %c0_64 = arith.constant 0 : index
    %132 = vector.load %arg13[%c0_63, %c0_64] : memref<16x32xf32, #tpu.memory_space<vmem>>, vector<16x32xf32>
    %133 = arith.truncf %132 : vector<16x32xf32> to vector<16x32xbf16>
    %c0_65 = arith.constant 0 : index
    %c0_66 = arith.constant 0 : index
    %134 = vector.load %arg8[%c0_65, %c0_66] : memref<32x8xbf16, #tpu.memory_space<vmem>>, vector<32x8xbf16>
    %cst_67 = arith.constant dense<0.000000e+00> : vector<16x8xf32>
    %135 = tpu.matmul %133, %134, %cst_67 {dimension_numbers = #tpu.dot_dimension_numbers<[1], [0], [0], [1], [0, 0, 1, 1], [], []>} : vector<16x32xbf16>, vector<32x8xbf16>, vector<16x8xf32> -> vector<16x8xf32>
    %c0_68 = arith.constant 0 : index
    %c0_69 = arith.constant 0 : index
    %136 = vector.load %arg9[%c0_68, %c0_69] : memref<1x8xf32, #tpu.memory_space<vmem>>, vector<1x8xf32>
    %137 = vector.broadcast %136 : vector<1x8xf32> to vector<16x8xf32>
    %138 = arith.addf %135, %137 : vector<16x8xf32>
    %c0_70 = arith.constant 0 : index
    %c0_71 = arith.constant 0 : index
    %139 = vector.load %arg11[%c0_70, %c0_71] : memref<16x8xf32, #tpu.memory_space<vmem>>, vector<16x8xf32>
    tpu.vector_store %arg11[%c0_70, %c0_71], %138 {strides = array<i32>} : memref<16x8xf32, #tpu.memory_space<vmem>>, vector<16x8xf32>,
    return
  }
}

</mosaic_0001>

<llo_original>
// kernel: drnn_bert_forward.1
$region0: #{drnn_bert_forward.1}
  #allocation0 [shape = 'u32[]', space=smem, size = 0x4, offset = 0x4, fixed_abs, tag = 'smem constant byte address 0x4 - core index']
  #allocation1 [shape = 'u32[144,128]{1,0:T(1,128)}', space=vmem, size = 0x12000, scoped, tag = 'internal scratch']
  #allocation2 [shape = 'f32[16,32]{1,0:T(8,128)}', space=vmem, size = 0x2000, scoped, tag = 'scratch operand']
  #allocation3 [shape = 'f32[16,32]{1,0:T(8,128)}', space=vmem, size = 0x2000, scoped, tag = 'scratch operand']
  %s0 = inlined_call_operand.vmem [shape: bf16[16,768], index: 0, kind: input, shape index: {}]
  %s1 = inlined_call_operand.vmem [shape: bf16[768,32], index: 1, kind: input, shape index: {}]
  %s2 = inlined_call_operand.vmem [shape: bf16[32,32], index: 2, kind: input, shape index: {}]
  %s3 = inlined_call_operand.vmem [shape: f32[1,32], index: 3, kind: input, shape index: {}]
  %s4 = inlined_call_operand.vmem [shape: bf16[64,32], index: 4, kind: input, shape index: {}]
  %s5 = inlined_call_operand.vmem [shape: f32[1,32], index: 5, kind: input, shape index: {}]
  %s6 = inlined_call_operand.vmem [shape: bf16[32,16], index: 6, kind: input, shape index: {}]
  %s7 = inlined_call_operand.vmem [shape: f32[1,16], index: 7, kind: input, shape index: {}]
  %s8 = inlined_call_operand.vmem [shape: bf16[32,8], index: 8, kind: input, shape index: {}]
  %s9 = inlined_call_operand.vmem [shape: f32[1,8], index: 9, kind: input, shape index: {}]
  %s10 = inlined_call_operand.vmem [shape: f32[16,16], index: 10, kind: output, shape index: {0}]
  %s11 = inlined_call_operand.vmem [shape: f32[16,8], index: 11, kind: output, shape index: {1}]
  %12 = xla_tuple %s10, %s11
  %s13 = sld [smem:[#allocation0]]
  $region58: #{drnn_bert_forward.1} parent=0
    _
  %s15 = ssub.s32 1, %s13
  %s16 = scalar_select 0, %s15, %s13
  // Predicated region
  $region2: #{drnn_bert_forward.1} parent=0 // pred_check
    _
  $region3: #{drnn_bert_forward.1} parent=0 // pred_check_branch
    %18 = sbr.rel (0) target = $region5
  $region4: #{drnn_bert_forward.1} parent=0 // pred_region
    _
  $region5: #{drnn_bert_forward.1} parent=0 // pred_fallthru
    _
  // Predicated region
  $region6: #{drnn_bert_forward.1} parent=0 // pred_check
    _
  $region7: #{drnn_bert_forward.1} parent=0 // pred_check_branch
    %20 = sbr.rel (0) target = $region9
  $region8: #{drnn_bert_forward.1} parent=0 // pred_region
    _
  $region9: #{drnn_bert_forward.1} parent=0 // pred_fallthru
    _
  // Predicated region
  $region10: #{drnn_bert_forward.1} parent=0 // pred_check
    _
  $region11: #{drnn_bert_forward.1} parent=0 // pred_check_branch
    %22 = sbr.rel (0) target = $region13
  $region12: #{drnn_bert_forward.1} parent=0 // pred_region
    _
  $region13: #{drnn_bert_forward.1} parent=0 // pred_fallthru
    _
  // Predicated region
  $region14: #{drnn_bert_forward.1} parent=0 // pred_check
    _
  $region15: #{drnn_bert_forward.1} parent=0 // pred_check_branch
    %24 = sbr.rel (0) target = $region17
  $region16: #{drnn_bert_forward.1} parent=0 // pred_region
    _
  $region17: #{drnn_bert_forward.1} parent=0 // pred_fallthru
    _
  // Predicated region
  $region18: #{drnn_bert_forward.1} parent=0 // pred_check
    _
  $region19: #{drnn_bert_forward.1} parent=0 // pred_check_branch
    %26 = sbr.rel (0) target = $region21
  $region20: #{drnn_bert_forward.1} parent=0 // pred_region
    _
  $region21: #{drnn_bert_forward.1} parent=0 // pred_fallthru
    _
  // Predicated region
  $region22: #{drnn_bert_forward.1} parent=0 // pred_check
    _
  $region23: #{drnn_bert_forward.1} parent=0 // pred_check_branch
    %28 = sbr.rel (0) target = $region25
  $region24: #{drnn_bert_forward.1} parent=0 // pred_region
    _
  $region25: #{drnn_bert_forward.1} parent=0 // pred_fallthru
    _
  // Predicated region
  $region26: #{drnn_bert_forward.1} parent=0 // pred_check
    _
  $region27: #{drnn_bert_forward.1} parent=0 // pred_check_branch
    %30 = sbr.rel (0) target = $region29
  $region28: #{drnn_bert_forward.1} parent=0 // pred_region
    _
  $region29: #{drnn_bert_forward.1} parent=0 // pred_fallthru
    _
  // Predicated region
  $region30: #{drnn_bert_forward.1} parent=0 // pred_check
    _
  $region31: #{drnn_bert_forward.1} parent=0 // pred_check_branch
    %32 = sbr.rel (0) target = $region33
  $region32: #{drnn_bert_forward.1} parent=0 // pred_region
    _
  $region33: #{drnn_bert_forward.1} parent=0 // pred_fallthru
    _
  // Predicated region
  $region34: #{drnn_bert_forward.1} parent=0 // pred_check
    _
  $region35: #{drnn_bert_forward.1} parent=0 // pred_check_branch
    %34 = sbr.rel (0) target = $region37
  $region36: #{drnn_bert_forward.1} parent=0 // pred_region
    _
  $region37: #{drnn_bert_forward.1} parent=0 // pred_fallthru
    _
  // Predicated region
  $region38: #{drnn_bert_forward.1} parent=0 // pred_check
    _
  $region39: #{drnn_bert_forward.1} parent=0 // pred_check_branch
    %36 = sbr.rel (0) target = $region41
  $region40: #{drnn_bert_forward.1} parent=0 // pred_region
    _
  $region41: #{drnn_bert_forward.1} parent=0 // pred_fallthru
    _
  %v38 = vld [vmem:[%s0] sm:$0xff]
  %v39 = vld [vmem:[%s0 + $0x8] sm:$0xff]
  %v40 = vld [vmem:[%s0 + $0x10] sm:$0xff]
  %v41 = vld [vmem:[%s0 + $0x18] sm:$0xff]
  %v42 = vld [vmem:[%s0 + $0x20] sm:$0xff]
  %v43 = vld [vmem:[%s0 + $0x28] sm:$0xff]
  %v44 = vld [vmem:[%s1] sm:$0xf]
  %v45 = vld [vmem:[%s1 + $0x4] sm:$0xf]
  %v46 = vld [vmem:[%s1 + $0x8] sm:$0xf]
  %v47 = vld [vmem:[%s1 + $0xc] sm:$0xf]
  %v48 = vld [vmem:[%s1 + $0x10] sm:$0xf]
  %v49 = vld [vmem:[%s1 + $0x14] sm:$0xf]
  %v50 = vld [vmem:[%s1 + $0x18] sm:$0xf]
  %v51 = vld [vmem:[%s1 + $0x1c] sm:$0xf]
  %v52 = vld [vmem:[%s1 + $0x20] sm:$0xf]
  %v53 = vld [vmem:[%s1 + $0x24] sm:$0xf]
  %v54 = vld [vmem:[%s1 + $0x28] sm:$0xf]
  %v55 = vld [vmem:[%s1 + $0x2c] sm:$0xf]
  %v56 = vld [vmem:[%s1 + $0x30] sm:$0xf]
  %v57 = vld [vmem:[%s1 + $0x34] sm:$0xf]
  %v58 = vld [vmem:[%s1 + $0x38] sm:$0xf]
  %v59 = vld [vmem:[%s1 + $0x3c] sm:$0xf]
  %v60 = vld [vmem:[%s1 + $0x40] sm:$0xf]
  %v61 = vld [vmem:[%s1 + $0x44] sm:$0xf]
  %v62 = vld [vmem:[%s1 + $0x48] sm:$0xf]
  %v63 = vld [vmem:[%s1 + $0x4c] sm:$0xf]
  %v64 = vld [vmem:[%s1 + $0x50] sm:$0xf]
  %v65 = vld [vmem:[%s1 + $0x54] sm:$0xf]
  %v66 = vld [vmem:[%s1 + $0x58] sm:$0xf]
  %v67 = vld [vmem:[%s1 + $0x5c] sm:$0xf]
  %v68 = vld [vmem:[%s1 + $0x60] sm:$0xf]
  %v69 = vld [vmem:[%s1 + $0x64] sm:$0xf]
  %v70 = vld [vmem:[%s1 + $0x68] sm:$0xf]
  %v71 = vld [vmem:[%s1 + $0x6c] sm:$0xf]
  %v72 = vld [vmem:[%s1 + $0x70] sm:$0xf]
  %v73 = vld [vmem:[%s1 + $0x74] sm:$0xf]
  %v74 = vld [vmem:[%s1 + $0x78] sm:$0xf]
  %v75 = vld [vmem:[%s1 + $0x7c] sm:$0xf]
  %v76 = vld [vmem:[%s1 + $0x80] sm:$0xf]
  %v77 = vld [vmem:[%s1 + $0x84] sm:$0xf]
  %v78 = vld [vmem:[%s1 + $0x88] sm:$0xf]
  %v79 = vld [vmem:[%s1 + $0x8c] sm:$0xf]
  %v80 = vld [vmem:[%s1 + $0x90] sm:$0xf]
  %v81 = vld [vmem:[%s1 + $0x94] sm:$0xf]
  %v82 = vld [vmem:[%s1 + $0x98] sm:$0xf]
  %v83 = vld [vmem:[%s1 + $0x9c] sm:$0xf]
  %v84 = vld [vmem:[%s1 + $0xa0] sm:$0xf]
  %v85 = vld [vmem:[%s1 + $0xa4] sm:$0xf]
  %v86 = vld [vmem:[%s1 + $0xa8] sm:$0xf]
  %v87 = vld [vmem:[%s1 + $0xac] sm:$0xf]
  %v88 = vld [vmem:[%s1 + $0xb0] sm:$0xf]
  %v89 = vld [vmem:[%s1 + $0xb4] sm:$0xf]
  %v90 = vld [vmem:[%s1 + $0xb8] sm:$0xf]
  %v91 = vld [vmem:[%s1 + $0xbc] sm:$0xf]
  %v92 = vld [vmem:[%s1 + $0xc0] sm:$0xf]
  %v93 = vld [vmem:[%s1 + $0xc4] sm:$0xf]
  %v94 = vld [vmem:[%s1 + $0xc8] sm:$0xf]
  %v95 = vld [vmem:[%s1 + $0xcc] sm:$0xf]
  %v96 = vld [vmem:[%s1 + $0xd0] sm:$0xf]
  %v97 = vld [vmem:[%s1 + $0xd4] sm:$0xf]
  %v98 = vld [vmem:[%s1 + $0xd8] sm:$0xf]
  %v99 = vld [vmem:[%s1 + $0xdc] sm:$0xf]
  %v100 = vld [vmem:[%s1 + $0xe0] sm:$0xf]
  %v101 = vld [vmem:[%s1 + $0xe4] sm:$0xf]
  %v102 = vld [vmem:[%s1 + $0xe8] sm:$0xf]
  %v103 = vld [vmem:[%s1 + $0xec] sm:$0xf]
  %v104 = vld [vmem:[%s1 + $0xf0] sm:$0xf]
  %v105 = vld [vmem:[%s1 + $0xf4] sm:$0xf]
  %v106 = vld [vmem:[%s1 + $0xf8] sm:$0xf]
  %v107 = vld [vmem:[%s1 + $0xfc] sm:$0xf]
  %v108 = vld [vmem:[%s1 + $0x100] sm:$0xf]
  %v109 = vld [vmem:[%s1 + $0x104] sm:$0xf]
  %v110 = vld [vmem:[%s1 + $0x108] sm:$0xf]
  %v111 = vld [vmem:[%s1 + $0x10c] sm:$0xf]
  %v112 = vld [vmem:[%s1 + $0x110] sm:$0xf]
  %v113 = vld [vmem:[%s1 + $0x114] sm:$0xf]
  %v114 = vld [vmem:[%s1 + $0x118] sm:$0xf]
  %v115 = vld [vmem:[%s1 + $0x11c] sm:$0xf]
  %v116 = vld [vmem:[%s1 + $0x120] sm:$0xf]
  %v117 = vld [vmem:[%s1 + $0x124] sm:$0xf]
  %v118 = vld [vmem:[%s1 + $0x128] sm:$0xf]
  %v119 = vld [vmem:[%s1 + $0x12c] sm:$0xf]
  %v120 = vld [vmem:[%s1 + $0x130] sm:$0xf]
  %v121 = vld [vmem:[%s1 + $0x134] sm:$0xf]
  %v122 = vld [vmem:[%s1 + $0x138] sm:$0xf]
  %v123 = vld [vmem:[%s1 + $0x13c] sm:$0xf]
  %v124 = vld [vmem:[%s1 + $0x140] sm:$0xf]
  %v125 = vld [vmem:[%s1 + $0x144] sm:$0xf]
  %v126 = vld [vmem:[%s1 + $0x148] sm:$0xf]
  %v127 = vld [vmem:[%s1 + $0x14c] sm:$0xf]
  %v128 = vld [vmem:[%s1 + $0x150] sm:$0xf]
  %v129 = vld [vmem:[%s1 + $0x154] sm:$0xf]
  %v130 = vld [vmem:[%s1 + $0x158] sm:$0xf]
  %v131 = vld [vmem:[%s1 + $0x15c] sm:$0xf]
  %v132 = vld [vmem:[%s1 + $0x160] sm:$0xf]
  %v133 = vld [vmem:[%s1 + $0x164] sm:$0xf]
  %v134 = vld [vmem:[%s1 + $0x168] sm:$0xf]
  %v135 = vld [vmem:[%s1 + $0x16c] sm:$0xf]
  %v136 = vld [vmem:[%s1 + $0x170] sm:$0xf]
  %v137 = vld [vmem:[%s1 + $0x174] sm:$0xf]
  %v138 = vld [vmem:[%s1 + $0x178] sm:$0xf]
  %v139 = vld [vmem:[%s1 + $0x17c] sm:$0xf]
  %v140 = vld [vmem:[%s3] sm:$0x1]
  %v142 = vlaneseq
  %v143 = vshrl.u32 %v142, 7
  %v144 = vsub.s32 0, %v143
  %v145 = vrot.slane %v140, %v144
  %v153 = vunpack.c.l.b16 %v38
  %v154 = vunpack.c.h.b16 %v38
  %v155 = vunpack.c.l.b16 %v39
  %v156 = vunpack.c.h.b16 %v39
  %v157 = vunpack.c.l.b16 %v40
  %v158 = vunpack.c.h.b16 %v40
  %v159 = vunpack.c.l.b16 %v41
  %v160 = vunpack.c.h.b16 %v41
  %v161 = vunpack.c.l.b16 %v42
  %v162 = vunpack.c.h.b16 %v42
  %v163 = vunpack.c.l.b16 %v43
  %v164 = vunpack.c.h.b16 %v43
  %v165 = vpack.c.b16 %v159, %v153
  %v166 = vpack.c.b16 %v160, %v154
  %v167 = vpack.c.b16 %v161, %v155
  %v168 = vpack.c.b16 %v162, %v156
  %v169 = vpack.c.b16 %v163, %v157
  %v170 = vpack.c.b16 %v164, %v158
  %v273 = vunpack.c.l.b16 %v44
  %v274 = vunpack.c.l.b16 %v45
  %v275 = vunpack.c.l.b16 %v46
  %v276 = vunpack.c.l.b16 %v47
  %v277 = vunpack.c.l.b16 %v48
  %v278 = vunpack.c.l.b16 %v49
  %v279 = vunpack.c.l.b16 %v50
  %v280 = vunpack.c.l.b16 %v51
  %v281 = vunpack.c.l.b16 %v52
  %v282 = vunpack.c.l.b16 %v53
  %v283 = vunpack.c.l.b16 %v54
  %v284 = vunpack.c.l.b16 %v55
  %v285 = vunpack.c.l.b16 %v56
  %v286 = vunpack.c.l.b16 %v57
  %v287 = vunpack.c.l.b16 %v58
  %v288 = vunpack.c.l.b16 %v59
  %v289 = vunpack.c.l.b16 %v60
  %v290 = vunpack.c.l.b16 %v61
  %v291 = vunpack.c.l.b16 %v62
  %v292 = vunpack.c.l.b16 %v63
  %v293 = vunpack.c.l.b16 %v64
  %v294 = vunpack.c.l.b16 %v65
  %v295 = vunpack.c.l.b16 %v66
  %v296 = vunpack.c.l.b16 %v67
  %v297 = vunpack.c.l.b16 %v68
  %v298 = vunpack.c.l.b16 %v69
  %v299 = vunpack.c.l.b16 %v70
  %v300 = vunpack.c.l.b16 %v71
  %v301 = vunpack.c.l.b16 %v72
  %v302 = vunpack.c.l.b16 %v73
  %v303 = vunpack.c.l.b16 %v74
  %v304 = vunpack.c.l.b16 %v75
  %v305 = vunpack.c.l.b16 %v76
  %v306 = vunpack.c.l.b16 %v77
  %v307 = vunpack.c.l.b16 %v78
  %v308 = vunpack.c.l.b16 %v79
  %v309 = vunpack.c.l.b16 %v80
  %v310 = vunpack.c.l.b16 %v81
  %v311 = vunpack.c.l.b16 %v82
  %v312 = vunpack.c.l.b16 %v83
  %v313 = vunpack.c.l.b16 %v84
  %v314 = vunpack.c.l.b16 %v85
  %v315 = vunpack.c.l.b16 %v86
  %v316 = vunpack.c.l.b16 %v87
  %v317 = vunpack.c.l.b16 %v88
  %v318 = vunpack.c.l.b16 %v89
  %v319 = vunpack.c.l.b16 %v90
  %v320 = vunpack.c.l.b16 %v91
  %v321 = vunpack.c.l.b16 %v92
  %v322 = vunpack.c.l.b16 %v93
  %v323 = vunpack.c.l.b16 %v94
  %v324 = vunpack.c.l.b16 %v95
  %v325 = vunpack.c.l.b16 %v96
  %v326 = vunpack.c.l.b16 %v97
  %v327 = vunpack.c.l.b16 %v98
  %v328 = vunpack.c.l.b16 %v99
  %v329 = vunpack.c.l.b16 %v100
  %v330 = vunpack.c.l.b16 %v101
  %v331 = vunpack.c.l.b16 %v102
  %v332 = vunpack.c.l.b16 %v103
  %v333 = vunpack.c.l.b16 %v104
  %v334 = vunpack.c.l.b16 %v105
  %v335 = vunpack.c.l.b16 %v106
  %v336 = vunpack.c.l.b16 %v107
  %v337 = vunpack.c.l.b16 %v108
  %v338 = vunpack.c.l.b16 %v109
  %v339 = vunpack.c.l.b16 %v110
  %v340 = vunpack.c.l.b16 %v111
  %v341 = vunpack.c.l.b16 %v112
  %v342 = vunpack.c.l.b16 %v113
  %v343 = vunpack.c.l.b16 %v114
  %v344 = vunpack.c.l.b16 %v115
  %v345 = vunpack.c.l.b16 %v116
  %v346 = vunpack.c.l.b16 %v117
  %v347 = vunpack.c.l.b16 %v118
  %v348 = vunpack.c.l.b16 %v119
  %v349 = vunpack.c.l.b16 %v120
  %v350 = vunpack.c.l.b16 %v121
  %v351 = vunpack.c.l.b16 %v122
  %v352 = vunpack.c.l.b16 %v123
  %v353 = vunpack.c.l.b16 %v124
  %v354 = vunpack.c.l.b16 %v125
  %v355 = vunpack.c.l.b16 %v126
  %v356 = vunpack.c.l.b16 %v127
  %v357 = vunpack.c.l.b16 %v128
  %v358 = vunpack.c.l.b16 %v129
  %v359 = vunpack.c.l.b16 %v130
  %v360 = vunpack.c.l.b16 %v131
  %v361 = vunpack.c.l.b16 %v132
  %v362 = vunpack.c.l.b16 %v133
  %v363 = vunpack.c.l.b16 %v134
  %v364 = vunpack.c.l.b16 %v135
  %v365 = vunpack.c.l.b16 %v136
  %v366 = vunpack.c.l.b16 %v137
  %v367 = vunpack.c.l.b16 %v138
  %v368 = vunpack.c.l.b16 %v139
  %v369 = vpack.c.b16 %v274, %v273
  %v370 = vpack.c.b16 %v276, %v275
  %v371 = vpack.c.b16 %v278, %v277
  %v372 = vpack.c.b16 %v280, %v279
  %v373 = vpack.c.b16 %v282, %v281
  %v374 = vpack.c.b16 %v284, %v283
  %v375 = vpack.c.b16 %v286, %v285
  %v376 = vpack.c.b16 %v288, %v287
  %v377 = vpack.c.b16 %v290, %v289
  %v378 = vpack.c.b16 %v292, %v291
  %v379 = vpack.c.b16 %v294, %v293
  %v380 = vpack.c.b16 %v296, %v295
  %v381 = vpack.c.b16 %v298, %v297
  %v382 = vpack.c.b16 %v300, %v299
  %v383 = vpack.c.b16 %v302, %v301
  %v384 = vpack.c.b16 %v304, %v303
  %v385 = vpack.c.b16 %v306, %v305
  %v386 = vpack.c.b16 %v308, %v307
  %v387 = vpack.c.b16 %v310, %v309
  %v388 = vpack.c.b16 %v312, %v311
  %v389 = vpack.c.b16 %v314, %v313
  %v390 = vpack.c.b16 %v316, %v315
  %v391 = vpack.c.b16 %v318, %v317
  %v392 = vpack.c.b16 %v320, %v319
  %v393 = vpack.c.b16 %v322, %v321
  %v394 = vpack.c.b16 %v324, %v323
  %v395 = vpack.c.b16 %v326, %v325
  %v396 = vpack.c.b16 %v328, %v327
  %v397 = vpack.c.b16 %v330, %v329
  %v398 = vpack.c.b16 %v332, %v331
  %v399 = vpack.c.b16 %v334, %v333
  %v400 = vpack.c.b16 %v336, %v335
  %v401 = vpack.c.b16 %v338, %v337
  %v402 = vpack.c.b16 %v340, %v339
  %v403 = vpack.c.b16 %v342, %v341
  %v404 = vpack.c.b16 %v344, %v343
  %v405 = vpack.c.b16 %v346, %v345
  %v406 = vpack.c.b16 %v348, %v347
  %v407 = vpack.c.b16 %v350, %v349
  %v408 = vpack.c.b16 %v352, %v351
  %v409 = vpack.c.b16 %v354, %v353
  %v410 = vpack.c.b16 %v356, %v355
  %v411 = vpack.c.b16 %v358, %v357
  %v412 = vpack.c.b16 %v360, %v359
  %v413 = vpack.c.b16 %v362, %v361
  %v414 = vpack.c.b16 %v364, %v363
  %v415 = vpack.c.b16 %v366, %v365
  %v416 = vpack.c.b16 %v368, %v367
  %465 = vmatprep.subr.bf16.mxu0 0
  %466 = vmatpush1.bf16.msra.mxu0 %v376
  %467 = vmatprep.subr.bf16.mxu0 0
  %468 = vmatpush1.bf16.msra.mxu0 %v375
  %469 = vmatprep.subr.bf16.mxu0 0
  %470 = vmatpush1.bf16.msra.mxu0 %v374
  %471 = vmatprep.subr.bf16.mxu0 0
  %472 = vmatpush1.bf16.msra.mxu0 %v373
  %473 = vmatprep.subr.bf16.mxu0 0
  %474 = vmatpush1.bf16.msra.mxu0 %v372
  %475 = vmatprep.subr.bf16.mxu0 0
  %476 = vmatpush1.bf16.msra.mxu0 %v371
  %477 = vmatprep.subr.bf16.mxu0 0
  %478 = vmatpush1.bf16.msra.mxu0 %v370
  %479 = vmatprep.subr.bf16.mxu0 0
  %480 = vmatpush1.bf16.msra.mxu0 %v369
  %481 = vmatprep.subr.bf16.mxu0 0
  %482 = vmatpush2.bf16.msra.mxu0 %v384
  %483 = vmatprep.subr.bf16.mxu0 0
  %484 = vmatpush2.bf16.msra.mxu0 %v383
  %485 = vmatprep.subr.bf16.mxu0 0
  %486 = vmatpush2.bf16.msra.mxu0 %v382
  %487 = vmatprep.subr.bf16.mxu0 0
  %488 = vmatpush2.bf16.msra.mxu0 %v381
  %489 = vmatprep.subr.bf16.mxu0 0
  %490 = vmatpush2.bf16.msra.mxu0 %v380
  %491 = vmatprep.subr.bf16.mxu0 0
  %492 = vmatpush2.bf16.msra.mxu0 %v379
  %493 = vmatprep.subr.bf16.mxu0 0
  %494 = vmatpush2.bf16.msra.mxu0 %v378
  %495 = vmatprep.subr.bf16.mxu0 0
  %496 = vmatpush2.bf16.msra.mxu0 %v377
  %497 = vmatprep.mubr.bf16.mxu0 %v166
  %498 = vmatmul.mubr.bf16.gmra.mxu0 %v165
  %v499 = vpop.f32.mrf.mxu0
  %v500 = vadd.f32 %v145, %v499
  %v501 = vpop.f32.mrf.mxu0
  %v502 = vpop.f32.mrf.mxu0
  %v503 = vadd.f32 %v145, %v502
  %v504 = vpop.f32.mrf.mxu0
  %505 = vdwg.mxu0
  %506 = vmatprep.subr.bf16.mxu0 0
  %507 = vmatpush1.bf16.msra.mxu0 %v392
  %508 = vmatprep.subr.bf16.mxu0 0
  %509 = vmatpush1.bf16.msra.mxu0 %v391
  %510 = vmatprep.subr.bf16.mxu0 0
  %511 = vmatpush1.bf16.msra.mxu0 %v390
  %512 = vmatprep.subr.bf16.mxu0 0
  %513 = vmatpush1.bf16.msra.mxu0 %v389
  %514 = vmatprep.subr.bf16.mxu0 0
  %515 = vmatpush1.bf16.msra.mxu0 %v388
  %516 = vmatprep.subr.bf16.mxu0 0
  %517 = vmatpush1.bf16.msra.mxu0 %v387
  %518 = vmatprep.subr.bf16.mxu0 0
  %519 = vmatpush1.bf16.msra.mxu0 %v386
  %520 = vmatprep.subr.bf16.mxu0 0
  %521 = vmatpush1.bf16.msra.mxu0 %v385
  %522 = vmatprep.subr.bf16.mxu0 0
  %523 = vmatpush2.bf16.msra.mxu0 %v400
  %524 = vmatprep.subr.bf16.mxu0 0
  %525 = vmatpush2.bf16.msra.mxu0 %v399
  %526 = vmatprep.subr.bf16.mxu0 0
  %527 = vmatpush2.bf16.msra.mxu0 %v398
  %528 = vmatprep.subr.bf16.mxu0 0
  %529 = vmatpush2.bf16.msra.mxu0 %v397
  %530 = vmatprep.subr.bf16.mxu0 0
  %531 = vmatpush2.bf16.msra.mxu0 %v396
  %532 = vmatprep.subr.bf16.mxu0 0
  %533 = vmatpush2.bf16.msra.mxu0 %v395
  %534 = vmatprep.subr.bf16.mxu0 0
  %535 = vmatpush2.bf16.msra.mxu0 %v394
  %536 = vmatprep.subr.bf16.mxu0 0
  %537 = vmatpush2.bf16.msra.mxu0 %v393
  %538 = vmatprep.mubr.bf16.mxu0 %v168
  %539 = vmatmul.mubr.bf16.gmra.mxu0 %v167
  %v540 = vpop.f32.mrf.mxu0
  %v541 = vadd.f32 %v500, %v540
  %v542 = vpop.f32.mrf.mxu0
  %v543 = vpop.f32.mrf.mxu0
  %v544 = vadd.f32 %v503, %v543
  %v545 = vpop.f32.mrf.mxu0
  %546 = vdwg.mxu0
  %547 = vmatprep.subr.bf16.mxu0 0
  %548 = vmatpush1.bf16.msra.mxu0 %v408
  %549 = vmatprep.subr.bf16.mxu0 0
  %550 = vmatpush1.bf16.msra.mxu0 %v407
  %551 = vmatprep.subr.bf16.mxu0 0
  %552 = vmatpush1.bf16.msra.mxu0 %v406
  %553 = vmatprep.subr.bf16.mxu0 0
  %554 = vmatpush1.bf16.msra.mxu0 %v405
  %555 = vmatprep.subr.bf16.mxu0 0
  %556 = vmatpush1.bf16.msra.mxu0 %v404
  %557 = vmatprep.subr.bf16.mxu0 0
  %558 = vmatpush1.bf16.msra.mxu0 %v403
  %559 = vmatprep.subr.bf16.mxu0 0
  %560 = vmatpush1.bf16.msra.mxu0 %v402
  %561 = vmatprep.subr.bf16.mxu0 0
  %562 = vmatpush1.bf16.msra.mxu0 %v401
  %563 = vmatprep.subr.bf16.mxu0 0
  %564 = vmatpush2.bf16.msra.mxu0 %v416
  %565 = vmatprep.subr.bf16.mxu0 0
  %566 = vmatpush2.bf16.msra.mxu0 %v415
  %567 = vmatprep.subr.bf16.mxu0 0
  %568 = vmatpush2.bf16.msra.mxu0 %v414
  %569 = vmatprep.subr.bf16.mxu0 0
  %570 = vmatpush2.bf16.msra.mxu0 %v413
  %571 = vmatprep.subr.bf16.mxu0 0
  %572 = vmatpush2.bf16.msra.mxu0 %v412
  %573 = vmatprep.subr.bf16.mxu0 0
  %574 = vmatpush2.bf16.msra.mxu0 %v411
  %575 = vmatprep.subr.bf16.mxu0 0
  %576 = vmatpush2.bf16.msra.mxu0 %v410
  %577 = vmatprep.subr.bf16.mxu0 0
  %578 = vmatpush2.bf16.msra.mxu0 %v409
  %579 = vmatprep.mubr.bf16.mxu0 %v170
  %580 = vmatmul.mubr.bf16.gmra.mxu0 %v169
  %v581 = vpop.f32.mrf.mxu0
  %v582 = vadd.f32 %v541, %v581
  %v583 = vpop.f32.mrf.mxu0
  %v584 = vpop.f32.mrf.mxu0
  %v585 = vadd.f32 %v544, %v584
  %v586 = vpop.f32.mrf.mxu0
  %587 = vdwg.mxu0
  %v588 = vld [vmem:[%s2] sm:$0xf]
  %v589 = vld [vmem:[%s2 + $0x4] sm:$0xf]
  %v590 = vld [vmem:[%s2 + $0x8] sm:$0xf]
  %v591 = vld [vmem:[%s2 + $0xc] sm:$0xf]
  %v592 = vld [vmem:[%s4] sm:$0xf]
  %v593 = vld [vmem:[%s4 + $0x4] sm:$0xf]
  %v594 = vld [vmem:[%s4 + $0x8] sm:$0xf]
  %v595 = vld [vmem:[%s4 + $0xc] sm:$0xf]
  %v596 = vld [vmem:[%s4 + $0x10] sm:$0xf]
  %v597 = vld [vmem:[%s4 + $0x14] sm:$0xf]
  %v598 = vld [vmem:[%s4 + $0x18] sm:$0xf]
  %v599 = vld [vmem:[%s4 + $0x1c] sm:$0xf]
  %v600 = vld [vmem:[%s5] sm:$0x1]
  %v605 = vunpack.c.l.b16 %v588
  %v606 = vunpack.c.l.b16 %v589
  %v607 = vunpack.c.l.b16 %v590
  %v608 = vunpack.c.l.b16 %v591
  %v609 = vpack.c.b16 %v606, %v605
  %v610 = vpack.c.b16 %v608, %v607
  %vm613 = vcmask 261120
  %v615 = vsel %vm613, 0, 0
  %617 = vmatprep.subr.bf16.mxu0 0
  %618 = vmatpush1.bf16.msra.mxu0 0
  %619 = vmatprep.subr.bf16.mxu0 0
  %620 = vmatpush1.bf16.msra.mxu0 0
  %621 = vmatprep.subr.bf16.mxu0 0
  %622 = vmatpush1.bf16.msra.mxu0 0
  %623 = vmatprep.subr.bf16.mxu0 0
  %624 = vmatpush1.bf16.msra.mxu0 0
  %625 = vmatprep.subr.bf16.mxu0 0
  %626 = vmatpush1.bf16.msra.mxu0 0
  %627 = vmatprep.subr.bf16.mxu0 0
  %628 = vmatpush1.bf16.msra.mxu0 0
  %629 = vmatprep.subr.bf16.mxu0 0
  %630 = vmatpush1.bf16.msra.mxu0 %v610
  %631 = vmatprep.subr.bf16.mxu0 0
  %632 = vmatpush1.bf16.msra.mxu0 %v609
  %633 = vmatprep.subr.bf16.mxu0 0
  %634 = vmatpush2.bf16.msra.mxu0 0
  %635 = vmatprep.subr.bf16.mxu0 0
  %636 = vmatpush2.bf16.msra.mxu0 0
  %637 = vmatprep.subr.bf16.mxu0 0
  %638 = vmatpush2.bf16.msra.mxu0 0
  %639 = vmatprep.subr.bf16.mxu0 0
  %640 = vmatpush2.bf16.msra.mxu0 0
  %641 = vmatprep.subr.bf16.mxu0 0
  %642 = vmatpush2.bf16.msra.mxu0 0
  %643 = vmatprep.subr.bf16.mxu0 0
  %644 = vmatpush2.bf16.msra.mxu0 0
  %645 = vmatprep.subr.bf16.mxu0 0
  %646 = vmatpush2.bf16.msra.mxu0 0
  %647 = vmatprep.subr.bf16.mxu0 0
  %648 = vmatpush2.bf16.msra.mxu0 0
  %649 = vmatprep.mubr.bf16.mxu0 0
  %650 = vmatmul.mubr.bf16.gmra.mxu0 %v615
  %v651 = vpop.f32.mrf.mxu0
  %v652 = vadd.f32 0.0, %v651
  %v653 = vpop.f32.mrf.mxu0
  %v654 = vpop.f32.mrf.mxu0
  %v655 = vpop.f32.mrf.mxu0
  %656 = vdwg.mxu0
  %v658 = vrot.slane %v652, 1
  %v661 = vadd.f32 %v582, %v652
  %v662 = vadd.f32 %v585, %v658
  %v663 = vtanh.pop %v661
  %v664 = vtanh.pop %v662
  %v667 = vrot.slane %v664, 7
  %vm668 = vcmask 1041409
  %v669 = vsel %vm668, %v667, %v663
  %v671 = vsel %vm613, %v669, 0.0
  %v672 = vpack.c.bf16 %v671, %v671
  %v674 = vlaneseq
  %v675 = vshrl.u32 %v674, 7
  %v676 = vsub.s32 0, %v675
  %v677 = vrot.slane %v600, %v676
  %v687 = vunpack.c.l.b16 %v592
  %v688 = vunpack.c.l.b16 %v593
  %v689 = vunpack.c.l.b16 %v594
  %v690 = vunpack.c.l.b16 %v595
  %v691 = vunpack.c.l.b16 %v596
  %v692 = vunpack.c.l.b16 %v597
  %v693 = vunpack.c.l.b16 %v598
  %v694 = vunpack.c.l.b16 %v599
  %v695 = vpack.c.b16 %v688, %v687
  %v696 = vpack.c.b16 %v690, %v689
  %v697 = vpack.c.b16 %v692, %v691
  %v698 = vpack.c.b16 %v694, %v693
  %vm703 = vcmask 523264
  %v705 = vsel %vm703, %v672, 0
  %707 = vmatprep.subr.bf16.mxu0 0
  %708 = vmatpush1.bf16.msra.mxu0 0
  %709 = vmatprep.subr.bf16.mxu0 0
  %710 = vmatpush1.bf16.msra.mxu0 0
  %711 = vmatprep.subr.bf16.mxu0 0
  %712 = vmatpush1.bf16.msra.mxu0 0
  %713 = vmatprep.subr.bf16.mxu0 0
  %714 = vmatpush1.bf16.msra.mxu0 0
  %715 = vmatprep.subr.bf16.mxu0 0
  %716 = vmatpush1.bf16.msra.mxu0 %v698
  %717 = vmatprep.subr.bf16.mxu0 0
  %718 = vmatpush1.bf16.msra.mxu0 %v697
  %719 = vmatprep.subr.bf16.mxu0 0
  %720 = vmatpush1.bf16.msra.mxu0 %v696
  %721 = vmatprep.subr.bf16.mxu0 0
  %722 = vmatpush1.bf16.msra.mxu0 %v695
  %723 = vmatprep.subr.bf16.mxu0 0
  %724 = vmatpush2.bf16.msra.mxu0 0
  %725 = vmatprep.subr.bf16.mxu0 0
  %726 = vmatpush2.bf16.msra.mxu0 0
  %727 = vmatprep.subr.bf16.mxu0 0
  %728 = vmatpush2.bf16.msra.mxu0 0
  %729 = vmatprep.subr.bf16.mxu0 0
  %730 = vmatpush2.bf16.msra.mxu0 0
  %731 = vmatprep.subr.bf16.mxu0 0
  %732 = vmatpush2.bf16.msra.mxu0 0
  %733 = vmatprep.subr.bf16.mxu0 0
  %734 = vmatpush2.bf16.msra.mxu0 0
  %735 = vmatprep.subr.bf16.mxu0 0
  %736 = vmatpush2.bf16.msra.mxu0 0
  %737 = vmatprep.subr.bf16.mxu0 0
  %738 = vmatpush2.bf16.msra.mxu0 0
  %739 = vmatprep.mubr.bf16.mxu0 0
  %740 = vmatmul.mubr.bf16.gmra.mxu0 %v705
  %v741 = vpop.f32.mrf.mxu0
  %v742 = vadd.f32 %v677, %v741
  %v743 = vpop.f32.mrf.mxu0
  %v744 = vpop.f32.mrf.mxu0
  %v745 = vpop.f32.mrf.mxu0
  %746 = vdwg.mxu0
  %v747 = vtanh.pop %v742
  %vm748 = vcmask 254976
  %749 = vst.msk [vmem:[#allocation2] sm:$0x3] %vm748, %v669
  %750 = vst.msk [vmem:[#allocation3] sm:$0x3] %vm748, %v747
  %v751 = vpack.c.bf16 %v663, %v663
  %v752 = vpack.c.bf16 %v664, %v664
  %v755 = vunpack.c.l.b16 %v751
  %v756 = vunpack.c.l.b16 %v752
  %v757 = vrot.slane %v756, 7
  %v758 = vsel %vm668, %v757, %v755
  %v759 = vpack.c.b16 %v758, %v758
  %v761 = vsel %vm613, %v759, 0
  %763 = vmatprep.subr.bf16.mxu0 0
  %764 = vmatpush1.bf16.msra.mxu0 0
  %765 = vmatprep.subr.bf16.mxu0 0
  %766 = vmatpush1.bf16.msra.mxu0 0
  %767 = vmatprep.subr.bf16.mxu0 0
  %768 = vmatpush1.bf16.msra.mxu0 0
  %769 = vmatprep.subr.bf16.mxu0 0
  %770 = vmatpush1.bf16.msra.mxu0 0
  %771 = vmatprep.subr.bf16.mxu0 0
  %772 = vmatpush1.bf16.msra.mxu0 0
  %773 = vmatprep.subr.bf16.mxu0 0
  %774 = vmatpush1.bf16.msra.mxu0 0
  %775 = vmatprep.subr.bf16.mxu0 0
  %776 = vmatpush1.bf16.msra.mxu0 %v610
  %777 = vmatprep.subr.bf16.mxu0 0
  %778 = vmatpush1.bf16.msra.mxu0 %v609
  %779 = vmatprep.subr.bf16.mxu0 0
  %780 = vmatpush2.bf16.msra.mxu0 0
  %781 = vmatprep.subr.bf16.mxu0 0
  %782 = vmatpush2.bf16.msra.mxu0 0
  %783 = vmatprep.subr.bf16.mxu0 0
  %784 = vmatpush2.bf16.msra.mxu0 0
  %785 = vmatprep.subr.bf16.mxu0 0
  %786 = vmatpush2.bf16.msra.mxu0 0
  %787 = vmatprep.subr.bf16.mxu0 0
  %788 = vmatpush2.bf16.msra.mxu0 0
  %789 = vmatprep.subr.bf16.mxu0 0
  %790 = vmatpush2.bf16.msra.mxu0 0
  %791 = vmatprep.subr.bf16.mxu0 0
  %792 = vmatpush2.bf16.msra.mxu0 0
  %793 = vmatprep.subr.bf16.mxu0 0
  %794 = vmatpush2.bf16.msra.mxu0 0
  %795 = vmatprep.mubr.bf16.mxu0 0
  %796 = vmatmul.mubr.bf16.gmra.mxu0 %v761
  %v797 = vpop.f32.mrf.mxu0
  %v798 = vadd.f32 0.0, %v797
  %v799 = vpop.f32.mrf.mxu0
  %v800 = vpop.f32.mrf.mxu0
  %v801 = vpop.f32.mrf.mxu0
  %802 = vdwg.mxu0
  %v804 = vrot.slane %v798, 7
  %v807 = vadd.f32 %v582, %v804
  %v808 = vadd.f32 %v585, %v798
  %v809 = vtanh.pop %v807
  %v810 = vtanh.pop %v808
  %v813 = vrot.slane %v810, 7
  %vm814 = vcmask 1042434
  %v815 = vsel %vm814, %v813, %v809
  %v818 = vrot.slane %v747, 7
  %819 = vrot.lane.b32.xlu0 %v818, 32
  %v820 = vpop.permute.xlu0 %819
  %v822 = vsel %vm613, %v815, %v820
  %v823 = vpack.c.bf16 %v822, %v822
  %v825 = vshrl.u32 %v823, 16
  %v827 = vshll.u32 %v823, 16
  %v829 = vrot.slane %v827, 1
  %v830 = vor.u32 %v825, %v829
  %v832 = vsel %vm703, %v830, 0
  %834 = vmatprep.subr.bf16.mxu0 0
  %835 = vmatpush1.bf16.msra.mxu0 0
  %836 = vmatprep.subr.bf16.mxu0 0
  %837 = vmatpush1.bf16.msra.mxu0 0
  %838 = vmatprep.subr.bf16.mxu0 0
  %839 = vmatpush1.bf16.msra.mxu0 0
  %840 = vmatprep.subr.bf16.mxu0 0
  %841 = vmatpush1.bf16.msra.mxu0 0
  %842 = vmatprep.subr.bf16.mxu0 0
  %843 = vmatpush1.bf16.msra.mxu0 %v698
  %844 = vmatprep.subr.bf16.mxu0 0
  %845 = vmatpush1.bf16.msra.mxu0 %v697
  %846 = vmatprep.subr.bf16.mxu0 0
  %847 = vmatpush1.bf16.msra.mxu0 %v696
  %848 = vmatprep.subr.bf16.mxu0 0
  %849 = vmatpush1.bf16.msra.mxu0 %v695
  %850 = vmatprep.subr.bf16.mxu0 0
  %851 = vmatpush2.bf16.msra.mxu0 0
  %852 = vmatprep.subr.bf16.mxu0 0
  %853 = vmatpush2.bf16.msra.mxu0 0
  %854 = vmatprep.subr.bf16.mxu0 0
  %855 = vmatpush2.bf16.msra.mxu0 0
  %856 = vmatprep.subr.bf16.mxu0 0
  %857 = vmatpush2.bf16.msra.mxu0 0
  %858 = vmatprep.subr.bf16.mxu0 0
  %859 = vmatpush2.bf16.msra.mxu0 0
  %860 = vmatprep.subr.bf16.mxu0 0
  %861 = vmatpush2.bf16.msra.mxu0 0
  %862 = vmatprep.subr.bf16.mxu0 0
  %863 = vmatpush2.bf16.msra.mxu0 0
  %864 = vmatprep.subr.bf16.mxu0 0
  %865 = vmatpush2.bf16.msra.mxu0 0
  %866 = vmatprep.mubr.bf16.mxu0 0
  %867 = vmatmul.mubr.bf16.gmra.mxu0 %v832
  %v868 = vpop.f32.mrf.mxu0
  %v869 = vadd.f32 %v677, %v868
  %v870 = vpop.f32.mrf.mxu0
  %v871 = vpop.f32.mrf.mxu0
  %v872 = vpop.f32.mrf.mxu0
  %873 = vdwg.mxu0
  %v874 = vtanh.pop %v869
  %vm875 = vcmask 256001
  %876 = vst.msk [vmem:[#allocation2 + $0x1] sm:$0x6] %vm875, %v815
  %877 = vst.msk [vmem:[#allocation3 + $0x2] sm:$0x3] %vm748, %v874
  %v878 = vpack.c.bf16 %v809, %v809
  %v879 = vpack.c.bf16 %v810, %v810
  %v882 = vunpack.c.l.b16 %v878
  %v883 = vunpack.c.l.b16 %v879
  %v884 = vrot.slane %v882, 1
  %v885 = vsel %vm668, %v883, %v884
  %v886 = vpack.c.b16 %v885, %v885
  %v888 = vsel %vm613, %v886, 0
  %890 = vmatprep.subr.bf16.mxu0 0
  %891 = vmatpush1.bf16.msra.mxu0 0
  %892 = vmatprep.subr.bf16.mxu0 0
  %893 = vmatpush1.bf16.msra.mxu0 0
  %894 = vmatprep.subr.bf16.mxu0 0
  %895 = vmatpush1.bf16.msra.mxu0 0
  %896 = vmatprep.subr.bf16.mxu0 0
  %897 = vmatpush1.bf16.msra.mxu0 0
  %898 = vmatprep.subr.bf16.mxu0 0
  %899 = vmatpush1.bf16.msra.mxu0 0
  %900 = vmatprep.subr.bf16.mxu0 0
  %901 = vmatpush1.bf16.msra.mxu0 0
  %902 = vmatprep.subr.bf16.mxu0 0
  %903 = vmatpush1.bf16.msra.mxu0 %v610
  %904 = vmatprep.subr.bf16.mxu0 0
  %905 = vmatpush1.bf16.msra.mxu0 %v609
  %906 = vmatprep.subr.bf16.mxu0 0
  %907 = vmatpush2.bf16.msra.mxu0 0
  %908 = vmatprep.subr.bf16.mxu0 0
  %909 = vmatpush2.bf16.msra.mxu0 0
  %910 = vmatprep.subr.bf16.mxu0 0
  %911 = vmatpush2.bf16.msra.mxu0 0
  %912 = vmatprep.subr.bf16.mxu0 0
  %913 = vmatpush2.bf16.msra.mxu0 0
  %914 = vmatprep.subr.bf16.mxu0 0
  %915 = vmatpush2.bf16.msra.mxu0 0
  %916 = vmatprep.subr.bf16.mxu0 0
  %917 = vmatpush2.bf16.msra.mxu0 0
  %918 = vmatprep.subr.bf16.mxu0 0
  %919 = vmatpush2.bf16.msra.mxu0 0
  %920 = vmatprep.subr.bf16.mxu0 0
  %921 = vmatpush2.bf16.msra.mxu0 0
  %922 = vmatprep.mubr.bf16.mxu0 0
  %923 = vmatmul.mubr.bf16.gmra.mxu0 %v888
  %v924 = vpop.f32.mrf.mxu0
  %v925 = vadd.f32 0.0, %v924
  %v926 = vpop.f32.mrf.mxu0
  %v927 = vpop.f32.mrf.mxu0
  %v928 = vpop.f32.mrf.mxu0
  %929 = vdwg.mxu0
  %v931 = vrot.slane %v925, 6
  %v932 = vrot.slane %v925, 7
  %v935 = vadd.f32 %v582, %v931
  %v936 = vadd.f32 %v585, %v932
  %v937 = vtanh.pop %v935
  %v938 = vtanh.pop %v936
  %v941 = vrot.slane %v938, 7
  %vm942 = vcmask 1043459
  %v943 = vsel %vm942, %v941, %v937
  %v946 = vrot.slane %v874, 6
  %947 = vrot.lane.b32.xlu0 %v946, 32
  %v948 = vpop.permute.xlu0 %947
  %v950 = vsel %vm613, %v943, %v948
  %v951 = vpack.c.bf16 %v950, %v950
  %v953 = vrot.slane %v951, 1
  %v955 = vsel %vm703, %v953, 0
  %957 = vmatprep.subr.bf16.mxu0 0
  %958 = vmatpush1.bf16.msra.mxu0 0
  %959 = vmatprep.subr.bf16.mxu0 0
  %960 = vmatpush1.bf16.msra.mxu0 0
  %961 = vmatprep.subr.bf16.mxu0 0
  %962 = vmatpush1.bf16.msra.mxu0 0
  %963 = vmatprep.subr.bf16.mxu0 0
  %964 = vmatpush1.bf16.msra.mxu0 0
  %965 = vmatprep.subr.bf16.mxu0 0
  %966 = vmatpush1.bf16.msra.mxu0 %v698
  %967 = vmatprep.subr.bf16.mxu0 0
  %968 = vmatpush1.bf16.msra.mxu0 %v697
  %969 = vmatprep.subr.bf16.mxu0 0
  %970 = vmatpush1.bf16.msra.mxu0 %v696
  %971 = vmatprep.subr.bf16.mxu0 0
  %972 = vmatpush1.bf16.msra.mxu0 %v695
  %973 = vmatprep.subr.bf16.mxu0 0
  %974 = vmatpush2.bf16.msra.mxu0 0
  %975 = vmatprep.subr.bf16.mxu0 0
  %976 = vmatpush2.bf16.msra.mxu0 0
  %977 = vmatprep.subr.bf16.mxu0 0
  %978 = vmatpush2.bf16.msra.mxu0 0
  %979 = vmatprep.subr.bf16.mxu0 0
  %980 = vmatpush2.bf16.msra.mxu0 0
  %981 = vmatprep.subr.bf16.mxu0 0
  %982 = vmatpush2.bf16.msra.mxu0 0
  %983 = vmatprep.subr.bf16.mxu0 0
  %984 = vmatpush2.bf16.msra.mxu0 0
  %985 = vmatprep.subr.bf16.mxu0 0
  %986 = vmatpush2.bf16.msra.mxu0 0
  %987 = vmatprep.subr.bf16.mxu0 0
  %988 = vmatpush2.bf16.msra.mxu0 0
  %989 = vmatprep.mubr.bf16.mxu0 0
  %990 = vmatmul.mubr.bf16.gmra.mxu0 %v955
  %v991 = vpop.f32.mrf.mxu0
  %v992 = vadd.f32 %v677, %v991
  %v993 = vpop.f32.mrf.mxu0
  %v994 = vpop.f32.mrf.mxu0
  %v995 = vpop.f32.mrf.mxu0
  %996 = vdwg.mxu0
  %v997 = vtanh.pop %v992
  %vm998 = vcmask 257026
  %999 = vst.msk [vmem:[#allocation2 + $0x2] sm:$0xc] %vm998, %v943
  %1000 = vst.msk [vmem:[#allocation3 + $0x4] sm:$0x3] %vm748, %v997
  %v1001 = vpack.c.bf16 %v937, %v937
  %v1002 = vpack.c.bf16 %v938, %v938
  %v1005 = vunpack.c.l.b16 %v1001
  %v1006 = vunpack.c.l.b16 %v1002
  %v1007 = vrot.slane %v1005, 2
  %v1008 = vrot.slane %v1006, 1
  %v1009 = vsel %vm668, %v1008, %v1007
  %v1010 = vpack.c.b16 %v1009, %v1009
  %v1012 = vsel %vm613, %v1010, 0
  %1014 = vmatprep.subr.bf16.mxu0 0
  %1015 = vmatpush1.bf16.msra.mxu0 0
  %1016 = vmatprep.subr.bf16.mxu0 0
  %1017 = vmatpush1.bf16.msra.mxu0 0
  %1018 = vmatprep.subr.bf16.mxu0 0
  %1019 = vmatpush1.bf16.msra.mxu0 0
  %1020 = vmatprep.subr.bf16.mxu0 0
  %1021 = vmatpush1.bf16.msra.mxu0 0
  %1022 = vmatprep.subr.bf16.mxu0 0
  %1023 = vmatpush1.bf16.msra.mxu0 0
  %1024 = vmatprep.subr.bf16.mxu0 0
  %1025 = vmatpush1.bf16.msra.mxu0 0
  %1026 = vmatprep.subr.bf16.mxu0 0
  %1027 = vmatpush1.bf16.msra.mxu0 %v610
  %1028 = vmatprep.subr.bf16.mxu0 0
  %1029 = vmatpush1.bf16.msra.mxu0 %v609
  %1030 = vmatprep.subr.bf16.mxu0 0
  %1031 = vmatpush2.bf16.msra.mxu0 0
  %1032 = vmatprep.subr.bf16.mxu0 0
  %1033 = vmatpush2.bf16.msra.mxu0 0
  %1034 = vmatprep.subr.bf16.mxu0 0
  %1035 = vmatpush2.bf16.msra.mxu0 0
  %1036 = vmatprep.subr.bf16.mxu0 0
  %1037 = vmatpush2.bf16.msra.mxu0 0
  %1038 = vmatprep.subr.bf16.mxu0 0
  %1039 = vmatpush2.bf16.msra.mxu0 0
  %1040 = vmatprep.subr.bf16.mxu0 0
  %1041 = vmatpush2.bf16.msra.mxu0 0
  %1042 = vmatprep.subr.bf16.mxu0 0
  %1043 = vmatpush2.bf16.msra.mxu0 0
  %1044 = vmatprep.subr.bf16.mxu0 0
  %1045 = vmatpush2.bf16.msra.mxu0 0
  %1046 = vmatprep.mubr.bf16.mxu0 0
  %1047 = vmatmul.mubr.bf16.gmra.mxu0 %v1012
  %v1048 = vpop.f32.mrf.mxu0
  %v1049 = vadd.f32 0.0, %v1048
  %v1050 = vpop.f32.mrf.mxu0
  %v1051 = vpop.f32.mrf.mxu0
  %v1052 = vpop.f32.mrf.mxu0
  %1053 = vdwg.mxu0
  %v1055 = vrot.slane %v1049, 5
  %v1056 = vrot.slane %v1049, 6
  %v1059 = vadd.f32 %v582, %v1055
  %v1060 = vadd.f32 %v585, %v1056
  %v1061 = vtanh.pop %v1059
  %v1062 = vtanh.pop %v1060
  %v1065 = vrot.slane %v1062, 7
  %vm1066 = vcmask 1044484
  %v1067 = vsel %vm1066, %v1065, %v1061
  %v1070 = vrot.slane %v997, 5
  %1071 = vrot.lane.b32.xlu0 %v1070, 32
  %v1072 = vpop.permute.xlu0 %1071
  %v1074 = vsel %vm613, %v1067, %v1072
  %v1075 = vpack.c.bf16 %v1074, %v1074
  %v1077 = vshrl.u32 %v1075, 16
  %v1079 = vrot.slane %v1077, 1
  %v1080 = vshll.u32 %v1075, 16
  %v1082 = vrot.slane %v1080, 2
  %v1083 = vor.u32 %v1079, %v1082
  %v1085 = vsel %vm703, %v1083, 0
  %1087 = vmatprep.subr.bf16.mxu0 0
  %1088 = vmatpush1.bf16.msra.mxu0 0
  %1089 = vmatprep.subr.bf16.mxu0 0
  %1090 = vmatpush1.bf16.msra.mxu0 0
  %1091 = vmatprep.subr.bf16.mxu0 0
  %1092 = vmatpush1.bf16.msra.mxu0 0
  %1093 = vmatprep.subr.bf16.mxu0 0
  %1094 = vmatpush1.bf16.msra.mxu0 0
  %1095 = vmatprep.subr.bf16.mxu0 0
  %1096 = vmatpush1.bf16.msra.mxu0 %v698
  %1097 = vmatprep.subr.bf16.mxu0 0
  %1098 = vmatpush1.bf16.msra.mxu0 %v697
  %1099 = vmatprep.subr.bf16.mxu0 0
  %1100 = vmatpush1.bf16.msra.mxu0 %v696
  %1101 = vmatprep.subr.bf16.mxu0 0
  %1102 = vmatpush1.bf16.msra.mxu0 %v695
  %1103 = vmatprep.subr.bf16.mxu0 0
  %1104 = vmatpush2.bf16.msra.mxu0 0
  %1105 = vmatprep.subr.bf16.mxu0 0
  %1106 = vmatpush2.bf16.msra.mxu0 0
  %1107 = vmatprep.subr.bf16.mxu0 0
  %1108 = vmatpush2.bf16.msra.mxu0 0
  %1109 = vmatprep.subr.bf16.mxu0 0
  %1110 = vmatpush2.bf16.msra.mxu0 0
  %1111 = vmatprep.subr.bf16.mxu0 0
  %1112 = vmatpush2.bf16.msra.mxu0 0
  %1113 = vmatprep.subr.bf16.mxu0 0
  %1114 = vmatpush2.bf16.msra.mxu0 0
  %1115 = vmatprep.subr.bf16.mxu0 0
  %1116 = vmatpush2.bf16.msra.mxu0 0
  %1117 = vmatprep.subr.bf16.mxu0 0
  %1118 = vmatpush2.bf16.msra.mxu0 0
  %1119 = vmatprep.mubr.bf16.mxu0 0
  %1120 = vmatmul.mubr.bf16.gmra.mxu0 %v1085
  %v1121 = vpop.f32.mrf.mxu0
  %v1122 = vadd.f32 %v677, %v1121
  %v1123 = vpop.f32.mrf.mxu0
  %v1124 = vpop.f32.mrf.mxu0
  %v1125 = vpop.f32.mrf.mxu0
  %1126 = vdwg.mxu0
  %v1127 = vtanh.pop %v1122
  %vm1128 = vcmask 258051
  %1129 = vst.msk [vmem:[#allocation2 + $0x3] sm:$0x18] %vm1128, %v1067
  %1130 = vst.msk [vmem:[#allocation3 + $0x6] sm:$0x3] %vm748, %v1127
  %v1131 = vpack.c.bf16 %v1061, %v1061
  %v1132 = vpack.c.bf16 %v1062, %v1062
  %v1135 = vunpack.c.l.b16 %v1131
  %v1136 = vunpack.c.l.b16 %v1132
  %v1137 = vrot.slane %v1135, 3
  %v1138 = vrot.slane %v1136, 2
  %v1139 = vsel %vm668, %v1138, %v1137
  %v1140 = vpack.c.b16 %v1139, %v1139
  %v1142 = vsel %vm613, %v1140, 0
  %1144 = vmatprep.subr.bf16.mxu0 0
  %1145 = vmatpush1.bf16.msra.mxu0 0
  %1146 = vmatprep.subr.bf16.mxu0 0
  %1147 = vmatpush1.bf16.msra.mxu0 0
  %1148 = vmatprep.subr.bf16.mxu0 0
  %1149 = vmatpush1.bf16.msra.mxu0 0
  %1150 = vmatprep.subr.bf16.mxu0 0
  %1151 = vmatpush1.bf16.msra.mxu0 0
  %1152 = vmatprep.subr.bf16.mxu0 0
  %1153 = vmatpush1.bf16.msra.mxu0 0
  %1154 = vmatprep.subr.bf16.mxu0 0
  %1155 = vmatpush1.bf16.msra.mxu0 0
  %1156 = vmatprep.subr.bf16.mxu0 0
  %1157 = vmatpush1.bf16.msra.mxu0 %v610
  %1158 = vmatprep.subr.bf16.mxu0 0
  %1159 = vmatpush1.bf16.msra.mxu0 %v609
  %1160 = vmatprep.subr.bf16.mxu0 0
  %1161 = vmatpush2.bf16.msra.mxu0 0
  %1162 = vmatprep.subr.bf16.mxu0 0
  %1163 = vmatpush2.bf16.msra.mxu0 0
  %1164 = vmatprep.subr.bf16.mxu0 0
  %1165 = vmatpush2.bf16.msra.mxu0 0
  %1166 = vmatprep.subr.bf16.mxu0 0
  %1167 = vmatpush2.bf16.msra.mxu0 0
  %1168 = vmatprep.subr.bf16.mxu0 0
  %1169 = vmatpush2.bf16.msra.mxu0 0
  %1170 = vmatprep.subr.bf16.mxu0 0
  %1171 = vmatpush2.bf16.msra.mxu0 0
  %1172 = vmatprep.subr.bf16.mxu0 0
  %1173 = vmatpush2.bf16.msra.mxu0 0
  %1174 = vmatprep.subr.bf16.mxu0 0
  %1175 = vmatpush2.bf16.msra.mxu0 0
  %1176 = vmatprep.mubr.bf16.mxu0 0
  %1177 = vmatmul.mubr.bf16.gmra.mxu0 %v1142
  %v1178 = vpop.f32.mrf.mxu0
  %v1179 = vadd.f32 0.0, %v1178
  %v1180 = vpop.f32.mrf.mxu0
  %v1181 = vpop.f32.mrf.mxu0
  %v1182 = vpop.f32.mrf.mxu0
  %1183 = vdwg.mxu0
  %v1185 = vrot.slane %v1179, 4
  %v1186 = vrot.slane %v1179, 5
  %v1189 = vadd.f32 %v582, %v1185
  %v1190 = vadd.f32 %v585, %v1186
  %v1191 = vtanh.pop %v1189
  %v1192 = vtanh.pop %v1190
  %v1195 = vrot.slane %v1192, 7
  %vm1196 = vcmask 1045509
  %v1197 = vsel %vm1196, %v1195, %v1191
  %v1200 = vrot.slane %v1127, 4
  %1201 = vrot.lane.b32.xlu0 %v1200, 32
  %v1202 = vpop.permute.xlu0 %1201
  %v1204 = vsel %vm613, %v1197, %v1202
  %v1205 = vpack.c.bf16 %v1204, %v1204
  %v1207 = vrot.slane %v1205, 2
  %v1209 = vsel %vm703, %v1207, 0
  %1211 = vmatprep.subr.bf16.mxu0 0
  %1212 = vmatpush1.bf16.msra.mxu0 0
  %1213 = vmatprep.subr.bf16.mxu0 0
  %1214 = vmatpush1.bf16.msra.mxu0 0
  %1215 = vmatprep.subr.bf16.mxu0 0
  %1216 = vmatpush1.bf16.msra.mxu0 0
  %1217 = vmatprep.subr.bf16.mxu0 0
  %1218 = vmatpush1.bf16.msra.mxu0 0
  %1219 = vmatprep.subr.bf16.mxu0 0
  %1220 = vmatpush1.bf16.msra.mxu0 %v698
  %1221 = vmatprep.subr.bf16.mxu0 0
  %1222 = vmatpush1.bf16.msra.mxu0 %v697
  %1223 = vmatprep.subr.bf16.mxu0 0
  %1224 = vmatpush1.bf16.msra.mxu0 %v696
  %1225 = vmatprep.subr.bf16.mxu0 0
  %1226 = vmatpush1.bf16.msra.mxu0 %v695
  %1227 = vmatprep.subr.bf16.mxu0 0
  %1228 = vmatpush2.bf16.msra.mxu0 0
  %1229 = vmatprep.subr.bf16.mxu0 0
  %1230 = vmatpush2.bf16.msra.mxu0 0
  %1231 = vmatprep.subr.bf16.mxu0 0
  %1232 = vmatpush2.bf16.msra.mxu0 0
  %1233 = vmatprep.subr.bf16.mxu0 0
  %1234 = vmatpush2.bf16.msra.mxu0 0
  %1235 = vmatprep.subr.bf16.mxu0 0
  %1236 = vmatpush2.bf16.msra.mxu0 0
  %1237 = vmatprep.subr.bf16.mxu0 0
  %1238 = vmatpush2.bf16.msra.mxu0 0
  %1239 = vmatprep.subr.bf16.mxu0 0
  %1240 = vmatpush2.bf16.msra.mxu0 0
  %1241 = vmatprep.subr.bf16.mxu0 0
  %1242 = vmatpush2.bf16.msra.mxu0 0
  %1243 = vmatprep.mubr.bf16.mxu0 0
  %1244 = vmatmul.mubr.bf16.gmra.mxu0 %v1209
  %v1245 = vpop.f32.mrf.mxu0
  %v1246 = vadd.f32 %v677, %v1245
  %v1247 = vpop.f32.mrf.mxu0
  %v1248 = vpop.f32.mrf.mxu0
  %v1249 = vpop.f32.mrf.mxu0
  %1250 = vdwg.mxu0
  %v1251 = vtanh.pop %v1246
  %vm1252 = vcmask 259076
  %1253 = vst.msk [vmem:[#allocation2 + $0x4] sm:$0x30] %vm1252, %v1197
  %1254 = vst.msk [vmem:[#allocation3 + $0x8] sm:$0x3] %vm748, %v1251
  %v1255 = vpack.c.bf16 %v1191, %v1191
  %v1256 = vpack.c.bf16 %v1192, %v1192
  %v1259 = vunpack.c.l.b16 %v1255
  %v1260 = vunpack.c.l.b16 %v1256
  %v1261 = vrot.slane %v1259, 4
  %v1262 = vrot.slane %v1260, 3
  %v1263 = vsel %vm668, %v1262, %v1261
  %v1264 = vpack.c.b16 %v1263, %v1263
  %v1266 = vsel %vm613, %v1264, 0
  %1268 = vmatprep.subr.bf16.mxu0 0
  %1269 = vmatpush1.bf16.msra.mxu0 0
  %1270 = vmatprep.subr.bf16.mxu0 0
  %1271 = vmatpush1.bf16.msra.mxu0 0
  %1272 = vmatprep.subr.bf16.mxu0 0
  %1273 = vmatpush1.bf16.msra.mxu0 0
  %1274 = vmatprep.subr.bf16.mxu0 0
  %1275 = vmatpush1.bf16.msra.mxu0 0
  %1276 = vmatprep.subr.bf16.mxu0 0
  %1277 = vmatpush1.bf16.msra.mxu0 0
  %1278 = vmatprep.subr.bf16.mxu0 0
  %1279 = vmatpush1.bf16.msra.mxu0 0
  %1280 = vmatprep.subr.bf16.mxu0 0
  %1281 = vmatpush1.bf16.msra.mxu0 %v610
  %1282 = vmatprep.subr.bf16.mxu0 0
  %1283 = vmatpush1.bf16.msra.mxu0 %v609
  %1284 = vmatprep.subr.bf16.mxu0 0
  %1285 = vmatpush2.bf16.msra.mxu0 0
  %1286 = vmatprep.subr.bf16.mxu0 0
  %1287 = vmatpush2.bf16.msra.mxu0 0
  %1288 = vmatprep.subr.bf16.mxu0 0
  %1289 = vmatpush2.bf16.msra.mxu0 0
  %1290 = vmatprep.subr.bf16.mxu0 0
  %1291 = vmatpush2.bf16.msra.mxu0 0
  %1292 = vmatprep.subr.bf16.mxu0 0
  %1293 = vmatpush2.bf16.msra.mxu0 0
  %1294 = vmatprep.subr.bf16.mxu0 0
  %1295 = vmatpush2.bf16.msra.mxu0 0
  %1296 = vmatprep.subr.bf16.mxu0 0
  %1297 = vmatpush2.bf16.msra.mxu0 0
  %1298 = vmatprep.subr.bf16.mxu0 0
  %1299 = vmatpush2.bf16.msra.mxu0 0
  %1300 = vmatprep.mubr.bf16.mxu0 0
  %1301 = vmatmul.mubr.bf16.gmra.mxu0 %v1266
  %v1302 = vpop.f32.mrf.mxu0
  %v1303 = vadd.f32 0.0, %v1302
  %v1304 = vpop.f32.mrf.mxu0
  %v1305 = vpop.f32.mrf.mxu0
  %v1306 = vpop.f32.mrf.mxu0
  %1307 = vdwg.mxu0
  %v1309 = vrot.slane %v1303, 3
  %v1310 = vrot.slane %v1303, 4
  %v1313 = vadd.f32 %v582, %v1309
  %v1314 = vadd.f32 %v585, %v1310
  %v1315 = vtanh.pop %v1313
  %v1316 = vtanh.pop %v1314
  %v1319 = vrot.slane %v1316, 7
  %vm1320 = vcmask 1046534
  %v1321 = vsel %vm1320, %v1319, %v1315
  %v1324 = vrot.slane %v1251, 3
  %1325 = vrot.lane.b32.xlu0 %v1324, 32
  %v1326 = vpop.permute.xlu0 %1325
  %v1328 = vsel %vm613, %v1321, %v1326
  %v1329 = vpack.c.bf16 %v1328, %v1328
  %v1331 = vshrl.u32 %v1329, 16
  %v1333 = vrot.slane %v1331, 2
  %v1334 = vshll.u32 %v1329, 16
  %v1336 = vrot.slane %v1334, 3
  %v1337 = vor.u32 %v1333, %v1336
  %v1339 = vsel %vm703, %v1337, 0
  %1341 = vmatprep.subr.bf16.mxu0 0
  %1342 = vmatpush1.bf16.msra.mxu0 0
  %1343 = vmatprep.subr.bf16.mxu0 0
  %1344 = vmatpush1.bf16.msra.mxu0 0
  %1345 = vmatprep.subr.bf16.mxu0 0
  %1346 = vmatpush1.bf16.msra.mxu0 0
  %1347 = vmatprep.subr.bf16.mxu0 0
  %1348 = vmatpush1.bf16.msra.mxu0 0
  %1349 = vmatprep.subr.bf16.mxu0 0
  %1350 = vmatpush1.bf16.msra.mxu0 %v698
  %1351 = vmatprep.subr.bf16.mxu0 0
  %1352 = vmatpush1.bf16.msra.mxu0 %v697
  %1353 = vmatprep.subr.bf16.mxu0 0
  %1354 = vmatpush1.bf16.msra.mxu0 %v696
  %1355 = vmatprep.subr.bf16.mxu0 0
  %1356 = vmatpush1.bf16.msra.mxu0 %v695
  %1357 = vmatprep.subr.bf16.mxu0 0
  %1358 = vmatpush2.bf16.msra.mxu0 0
  %1359 = vmatprep.subr.bf16.mxu0 0
  %1360 = vmatpush2.bf16.msra.mxu0 0
  %1361 = vmatprep.subr.bf16.mxu0 0
  %1362 = vmatpush2.bf16.msra.mxu0 0
  %1363 = vmatprep.subr.bf16.mxu0 0
  %1364 = vmatpush2.bf16.msra.mxu0 0
  %1365 = vmatprep.subr.bf16.mxu0 0
  %1366 = vmatpush2.bf16.msra.mxu0 0
  %1367 = vmatprep.subr.bf16.mxu0 0
  %1368 = vmatpush2.bf16.msra.mxu0 0
  %1369 = vmatprep.subr.bf16.mxu0 0
  %1370 = vmatpush2.bf16.msra.mxu0 0
  %1371 = vmatprep.subr.bf16.mxu0 0
  %1372 = vmatpush2.bf16.msra.mxu0 0
  %1373 = vmatprep.mubr.bf16.mxu0 0
  %1374 = vmatmul.mubr.bf16.gmra.mxu0 %v1339
  %v1375 = vpop.f32.mrf.mxu0
  %v1376 = vadd.f32 %v677, %v1375
  %v1377 = vpop.f32.mrf.mxu0
  %v1378 = vpop.f32.mrf.mxu0
  %v1379 = vpop.f32.mrf.mxu0
  %1380 = vdwg.mxu0
  %v1381 = vtanh.pop %v1376
  %vm1382 = vcmask 260101
  %1383 = vst.msk [vmem:[#allocation2 + $0x5] sm:$0x60] %vm1382, %v1321
  %1384 = vst.msk [vmem:[#allocation3 + $0xa] sm:$0x3] %vm748, %v1381
  %v1385 = vpack.c.bf16 %v1315, %v1315
  %v1386 = vpack.c.bf16 %v1316, %v1316
  %v1389 = vunpack.c.l.b16 %v1385
  %v1390 = vunpack.c.l.b16 %v1386
  %v1391 = vrot.slane %v1389, 5
  %v1392 = vrot.slane %v1390, 4
  %v1393 = vsel %vm668, %v1392, %v1391
  %v1394 = vpack.c.b16 %v1393, %v1393
  %v1396 = vsel %vm613, %v1394, 0
  %1398 = vmatprep.subr.bf16.mxu0 0
  %1399 = vmatpush1.bf16.msra.mxu0 0
  %1400 = vmatprep.subr.bf16.mxu0 0
  %1401 = vmatpush1.bf16.msra.mxu0 0
  %1402 = vmatprep.subr.bf16.mxu0 0
  %1403 = vmatpush1.bf16.msra.mxu0 0
  %1404 = vmatprep.subr.bf16.mxu0 0
  %1405 = vmatpush1.bf16.msra.mxu0 0
  %1406 = vmatprep.subr.bf16.mxu0 0
  %1407 = vmatpush1.bf16.msra.mxu0 0
  %1408 = vmatprep.subr.bf16.mxu0 0
  %1409 = vmatpush1.bf16.msra.mxu0 0
  %1410 = vmatprep.subr.bf16.mxu0 0
  %1411 = vmatpush1.bf16.msra.mxu0 %v610
  %1412 = vmatprep.subr.bf16.mxu0 0
  %1413 = vmatpush1.bf16.msra.mxu0 %v609
  %1414 = vmatprep.subr.bf16.mxu0 0
  %1415 = vmatpush2.bf16.msra.mxu0 0
  %1416 = vmatprep.subr.bf16.mxu0 0
  %1417 = vmatpush2.bf16.msra.mxu0 0
  %1418 = vmatprep.subr.bf16.mxu0 0
  %1419 = vmatpush2.bf16.msra.mxu0 0
  %1420 = vmatprep.subr.bf16.mxu0 0
  %1421 = vmatpush2.bf16.msra.mxu0 0
  %1422 = vmatprep.subr.bf16.mxu0 0
  %1423 = vmatpush2.bf16.msra.mxu0 0
  %1424 = vmatprep.subr.bf16.mxu0 0
  %1425 = vmatpush2.bf16.msra.mxu0 0
  %1426 = vmatprep.subr.bf16.mxu0 0
  %1427 = vmatpush2.bf16.msra.mxu0 0
  %1428 = vmatprep.subr.bf16.mxu0 0
  %1429 = vmatpush2.bf16.msra.mxu0 0
  %1430 = vmatprep.mubr.bf16.mxu0 0
  %1431 = vmatmul.mubr.bf16.gmra.mxu0 %v1396
  %v1432 = vpop.f32.mrf.mxu0
  %v1433 = vadd.f32 0.0, %v1432
  %v1434 = vpop.f32.mrf.mxu0
  %v1435 = vpop.f32.mrf.mxu0
  %v1436 = vpop.f32.mrf.mxu0
  %1437 = vdwg.mxu0
  %v1439 = vrot.slane %v1433, 2
  %v1440 = vrot.slane %v1433, 3
  %v1443 = vadd.f32 %v582, %v1439
  %v1444 = vadd.f32 %v585, %v1440
  %v1445 = vtanh.pop %v1443
  %v1446 = vtanh.pop %v1444
  %v1449 = vrot.slane %v1446, 7
  %vm1450 = vcmask 1047559
  %v1451 = vsel %vm1450, %v1449, %v1445
  %v1454 = vrot.slane %v1381, 2
  %1455 = vrot.lane.b32.xlu0 %v1454, 32
  %v1456 = vpop.permute.xlu0 %1455
  %v1458 = vsel %vm613, %v1451, %v1456
  %v1459 = vpack.c.bf16 %v1458, %v1458
  %v1461 = vrot.slane %v1459, 3
  %v1463 = vsel %vm703, %v1461, 0
  %1465 = vmatprep.subr.bf16.mxu0 0
  %1466 = vmatpush1.bf16.msra.mxu0 0
  %1467 = vmatprep.subr.bf16.mxu0 0
  %1468 = vmatpush1.bf16.msra.mxu0 0
  %1469 = vmatprep.subr.bf16.mxu0 0
  %1470 = vmatpush1.bf16.msra.mxu0 0
  %1471 = vmatprep.subr.bf16.mxu0 0
  %1472 = vmatpush1.bf16.msra.mxu0 0
  %1473 = vmatprep.subr.bf16.mxu0 0
  %1474 = vmatpush1.bf16.msra.mxu0 %v698
  %1475 = vmatprep.subr.bf16.mxu0 0
  %1476 = vmatpush1.bf16.msra.mxu0 %v697
  %1477 = vmatprep.subr.bf16.mxu0 0
  %1478 = vmatpush1.bf16.msra.mxu0 %v696
  %1479 = vmatprep.subr.bf16.mxu0 0
  %1480 = vmatpush1.bf16.msra.mxu0 %v695
  %1481 = vmatprep.subr.bf16.mxu0 0
  %1482 = vmatpush2.bf16.msra.mxu0 0
  %1483 = vmatprep.subr.bf16.mxu0 0
  %1484 = vmatpush2.bf16.msra.mxu0 0
  %1485 = vmatprep.subr.bf16.mxu0 0
  %1486 = vmatpush2.bf16.msra.mxu0 0
  %1487 = vmatprep.subr.bf16.mxu0 0
  %1488 = vmatpush2.bf16.msra.mxu0 0
  %1489 = vmatprep.subr.bf16.mxu0 0
  %1490 = vmatpush2.bf16.msra.mxu0 0
  %1491 = vmatprep.subr.bf16.mxu0 0
  %1492 = vmatpush2.bf16.msra.mxu0 0
  %1493 = vmatprep.subr.bf16.mxu0 0
  %1494 = vmatpush2.bf16.msra.mxu0 0
  %1495 = vmatprep.subr.bf16.mxu0 0
  %1496 = vmatpush2.bf16.msra.mxu0 0
  %1497 = vmatprep.mubr.bf16.mxu0 0
  %1498 = vmatmul.mubr.bf16.gmra.mxu0 %v1463
  %v1499 = vpop.f32.mrf.mxu0
  %v1500 = vadd.f32 %v677, %v1499
  %v1501 = vpop.f32.mrf.mxu0
  %v1502 = vpop.f32.mrf.mxu0
  %v1503 = vpop.f32.mrf.mxu0
  %1504 = vdwg.mxu0
  %v1505 = vtanh.pop %v1500
  %vm1506 = vcmask 261126
  %1507 = vst.msk [vmem:[#allocation2 + $0x6] sm:$0xc0] %vm1506, %v1451
  %1508 = vst.msk [vmem:[#allocation3 + $0xc] sm:$0x3] %vm748, %v1505
  %v1509 = vpack.c.bf16 %v1445, %v1445
  %v1510 = vpack.c.bf16 %v1446, %v1446
  %v1513 = vunpack.c.l.b16 %v1509
  %v1514 = vunpack.c.l.b16 %v1510
  %v1515 = vrot.slane %v1513, 6
  %v1516 = vrot.slane %v1514, 5
  %v1517 = vsel %vm668, %v1516, %v1515
  %v1518 = vpack.c.b16 %v1517, %v1517
  %v1520 = vsel %vm613, %v1518, 0
  %1522 = vmatprep.subr.bf16.mxu0 0
  %1523 = vmatpush1.bf16.msra.mxu0 0
  %1524 = vmatprep.subr.bf16.mxu0 0
  %1525 = vmatpush1.bf16.msra.mxu0 0
  %1526 = vmatprep.subr.bf16.mxu0 0
  %1527 = vmatpush1.bf16.msra.mxu0 0
  %1528 = vmatprep.subr.bf16.mxu0 0
  %1529 = vmatpush1.bf16.msra.mxu0 0
  %1530 = vmatprep.subr.bf16.mxu0 0
  %1531 = vmatpush1.bf16.msra.mxu0 0
  %1532 = vmatprep.subr.bf16.mxu0 0
  %1533 = vmatpush1.bf16.msra.mxu0 0
  %1534 = vmatprep.subr.bf16.mxu0 0
  %1535 = vmatpush1.bf16.msra.mxu0 %v610
  %1536 = vmatprep.subr.bf16.mxu0 0
  %1537 = vmatpush1.bf16.msra.mxu0 %v609
  %1538 = vmatprep.subr.bf16.mxu0 0
  %1539 = vmatpush2.bf16.msra.mxu0 0
  %1540 = vmatprep.subr.bf16.mxu0 0
  %1541 = vmatpush2.bf16.msra.mxu0 0
  %1542 = vmatprep.subr.bf16.mxu0 0
  %1543 = vmatpush2.bf16.msra.mxu0 0
  %1544 = vmatprep.subr.bf16.mxu0 0
  %1545 = vmatpush2.bf16.msra.mxu0 0
  %1546 = vmatprep.subr.bf16.mxu0 0
  %1547 = vmatpush2.bf16.msra.mxu0 0
  %1548 = vmatprep.subr.bf16.mxu0 0
  %1549 = vmatpush2.bf16.msra.mxu0 0
  %1550 = vmatprep.subr.bf16.mxu0 0
  %1551 = vmatpush2.bf16.msra.mxu0 0
  %1552 = vmatprep.subr.bf16.mxu0 0
  %1553 = vmatpush2.bf16.msra.mxu0 0
  %1554 = vmatprep.mubr.bf16.mxu0 0
  %1555 = vmatmul.mubr.bf16.gmra.mxu0 %v1520
  %v1556 = vpop.f32.mrf.mxu0
  %v1557 = vadd.f32 0.0, %v1556
  %v1558 = vpop.f32.mrf.mxu0
  %v1559 = vpop.f32.mrf.mxu0
  %v1560 = vpop.f32.mrf.mxu0
  %1561 = vdwg.mxu0
  %v1563 = vrot.slane %v1557, 1
  %v1564 = vrot.slane %v1557, 2
  %v1567 = vadd.f32 %v582, %v1563
  %v1568 = vadd.f32 %v585, %v1564
  %v1569 = vtanh.pop %v1567
  %v1570 = vtanh.pop %v1568
  %v1573 = vrot.slane %v1570, 7
  %v1577 = vrot.slane %v1505, 1
  %1578 = vrot.lane.b32.xlu0 %v1577, 32
  %v1579 = vpop.permute.xlu0 %1578
  %v1581 = vsel %vm613, %v1569, %v1579
  %v1582 = vsel %vm613, %v1573, %v1579
  %v1583 = vpack.c.bf16 %v1582, %v1581
  %v1585 = vshrl.u32 %v1583, 16
  %v1587 = vrot.slane %v1585, 3
  %v1588 = vshll.u32 %v1583, 16
  %v1590 = vrot.slane %v1588, 4
  %v1591 = vor.u32 %v1587, %v1590
  %v1593 = vsel %vm703, %v1591, 0
  %1595 = vmatprep.subr.bf16.mxu0 0
  %1596 = vmatpush1.bf16.msra.mxu0 0
  %1597 = vmatprep.subr.bf16.mxu0 0
  %1598 = vmatpush1.bf16.msra.mxu0 0
  %1599 = vmatprep.subr.bf16.mxu0 0
  %1600 = vmatpush1.bf16.msra.mxu0 0
  %1601 = vmatprep.subr.bf16.mxu0 0
  %1602 = vmatpush1.bf16.msra.mxu0 0
  %1603 = vmatprep.subr.bf16.mxu0 0
  %1604 = vmatpush1.bf16.msra.mxu0 %v698
  %1605 = vmatprep.subr.bf16.mxu0 0
  %1606 = vmatpush1.bf16.msra.mxu0 %v697
  %1607 = vmatprep.subr.bf16.mxu0 0
  %1608 = vmatpush1.bf16.msra.mxu0 %v696
  %1609 = vmatprep.subr.bf16.mxu0 0
  %1610 = vmatpush1.bf16.msra.mxu0 %v695
  %1611 = vmatprep.subr.bf16.mxu0 0
  %1612 = vmatpush2.bf16.msra.mxu0 0
  %1613 = vmatprep.subr.bf16.mxu0 0
  %1614 = vmatpush2.bf16.msra.mxu0 0
  %1615 = vmatprep.subr.bf16.mxu0 0
  %1616 = vmatpush2.bf16.msra.mxu0 0
  %1617 = vmatprep.subr.bf16.mxu0 0
  %1618 = vmatpush2.bf16.msra.mxu0 0
  %1619 = vmatprep.subr.bf16.mxu0 0
  %1620 = vmatpush2.bf16.msra.mxu0 0
  %1621 = vmatprep.subr.bf16.mxu0 0
  %1622 = vmatpush2.bf16.msra.mxu0 0
  %1623 = vmatprep.subr.bf16.mxu0 0
  %1624 = vmatpush2.bf16.msra.mxu0 0
  %1625 = vmatprep.subr.bf16.mxu0 0
  %1626 = vmatpush2.bf16.msra.mxu0 0
  %1627 = vmatprep.mubr.bf16.mxu0 0
  %1628 = vmatmul.mubr.bf16.gmra.mxu0 %v1593
  %v1629 = vpop.f32.mrf.mxu0
  %v1630 = vadd.f32 %v677, %v1629
  %v1631 = vpop.f32.mrf.mxu0
  %v1632 = vpop.f32.mrf.mxu0
  %v1633 = vpop.f32.mrf.mxu0
  %1634 = vdwg.mxu0
  %v1635 = vtanh.pop %v1630
  %vm1636 = vcmask 261127
  %1637 = vst.msk [vmem:[#allocation2 + $0x7] sm:$0x80] %vm1636, %v1569
  %vm1638 = vcmask 253952
  %1639 = vst.msk [vmem:[#allocation2 + $0xf] sm:$0x1] %vm1638, %v1573
  %1640 = vst.msk [vmem:[#allocation3 + $0xe] sm:$0x3] %vm748, %v1635
  %v1641 = vld [vmem:[#allocation2] sm:$0xff]
  %v1642 = vld [vmem:[#allocation2 + $0x8] sm:$0xff]
  %v1643 = vpack.c.bf16 %v1642, %v1641
  %v1644 = vld [vmem:[%s6] sm:$0xf]
  %v1645 = vld [vmem:[%s6 + $0x4] sm:$0xf]
  %v1646 = vld [vmem:[%s6 + $0x8] sm:$0xf]
  %v1647 = vld [vmem:[%s6 + $0xc] sm:$0xf]
  %v1648 = vld [vmem:[%s7] sm:$0x1]
  %v1650 = vlaneseq
  %v1651 = vshrl.u32 %v1650, 7
  %v1652 = vsub.s32 0, %v1651
  %v1653 = vrot.slane %v1648, %v1652
  %v1659 = vunpack.c.l.b16 %v1644
  %v1660 = vunpack.c.l.b16 %v1645
  %v1661 = vunpack.c.l.b16 %v1646
  %v1662 = vunpack.c.l.b16 %v1647
  %v1663 = vpack.c.b16 %v1660, %v1659
  %v1664 = vpack.c.b16 %v1662, %v1661
  %v1668 = vsel %vm613, %v1643, 0
  %1670 = vmatprep.subr.bf16.mxu0 0
  %1671 = vmatpush1.bf16.msra.mxu0 0
  %1672 = vmatprep.subr.bf16.mxu0 0
  %1673 = vmatpush1.bf16.msra.mxu0 0
  %1674 = vmatprep.subr.bf16.mxu0 0
  %1675 = vmatpush1.bf16.msra.mxu0 0
  %1676 = vmatprep.subr.bf16.mxu0 0
  %1677 = vmatpush1.bf16.msra.mxu0 0
  %1678 = vmatprep.subr.bf16.mxu0 0
  %1679 = vmatpush1.bf16.msra.mxu0 0
  %1680 = vmatprep.subr.bf16.mxu0 0
  %1681 = vmatpush1.bf16.msra.mxu0 0
  %1682 = vmatprep.subr.bf16.mxu0 0
  %1683 = vmatpush1.bf16.msra.mxu0 %v1664
  %1684 = vmatprep.subr.bf16.mxu0 0
  %1685 = vmatpush1.bf16.msra.mxu0 %v1663
  %1686 = vmatprep.subr.bf16.mxu0 0
  %1687 = vmatpush2.bf16.msra.mxu0 0
  %1688 = vmatprep.subr.bf16.mxu0 0
  %1689 = vmatpush2.bf16.msra.mxu0 0
  %1690 = vmatprep.subr.bf16.mxu0 0
  %1691 = vmatpush2.bf16.msra.mxu0 0
  %1692 = vmatprep.subr.bf16.mxu0 0
  %1693 = vmatpush2.bf16.msra.mxu0 0
  %1694 = vmatprep.subr.bf16.mxu0 0
  %1695 = vmatpush2.bf16.msra.mxu0 0
  %1696 = vmatprep.subr.bf16.mxu0 0
  %1697 = vmatpush2.bf16.msra.mxu0 0
  %1698 = vmatprep.subr.bf16.mxu0 0
  %1699 = vmatpush2.bf16.msra.mxu0 0
  %1700 = vmatprep.subr.bf16.mxu0 0
  %1701 = vmatpush2.bf16.msra.mxu0 0
  %1702 = vmatprep.mubr.bf16.mxu0 0
  %1703 = vmatmul.mubr.bf16.gmra.mxu0 %v1668
  %v1704 = vpop.f32.mrf.mxu0
  %v1705 = vadd.f32 %v1653, %v1704
  %v1706 = vpop.f32.mrf.mxu0
  %v1707 = vpop.f32.mrf.mxu0
  %v1708 = vadd.f32 %v1653, %v1707
  %v1709 = vpop.f32.mrf.mxu0
  %1710 = vdwg.mxu0
  %vm1711 = vcmask 130048
  %1712 = vst.msk [vmem:[%s10] sm:$0xff] %vm1711, %v1705
  %1713 = vst.msk [vmem:[%s10 + $0x8] sm:$0xff] %vm1711, %v1708
  %v1714 = vld [vmem:[#allocation3] sm:$0xff]
  %v1715 = vld [vmem:[#allocation3 + $0x8] sm:$0xff]
  %v1716 = vpack.c.bf16 %v1715, %v1714
  %v1717 = vld [vmem:[%s8] sm:$0xf]
  %v1718 = vld [vmem:[%s8 + $0x4] sm:$0xf]
  %v1719 = vld [vmem:[%s8 + $0x8] sm:$0xf]
  %v1720 = vld [vmem:[%s8 + $0xc] sm:$0xf]
  %v1721 = vld [vmem:[%s9] sm:$0x1]
  %v1723 = vlaneseq
  %v1724 = vshrl.u32 %v1723, 7
  %v1725 = vsub.s32 0, %v1724
  %v1726 = vrot.slane %v1721, %v1725
  %v1732 = vunpack.c.l.b16 %v1717
  %v1733 = vunpack.c.l.b16 %v1718
  %v1734 = vunpack.c.l.b16 %v1719
  %v1735 = vunpack.c.l.b16 %v1720
  %v1736 = vpack.c.b16 %v1733, %v1732
  %v1737 = vpack.c.b16 %v1735, %v1734
  %v1741 = vsel %vm613, %v1716, 0
  %1743 = vmatprep.subr.bf16.mxu0 0
  %1744 = vmatpush1.bf16.msra.mxu0 0
  %1745 = vmatprep.subr.bf16.mxu0 0
  %1746 = vmatpush1.bf16.msra.mxu0 0
  %1747 = vmatprep.subr.bf16.mxu0 0
  %1748 = vmatpush1.bf16.msra.mxu0 0
  %1749 = vmatprep.subr.bf16.mxu0 0
  %1750 = vmatpush1.bf16.msra.mxu0 0
  %1751 = vmatprep.subr.bf16.mxu0 0
  %1752 = vmatpush1.bf16.msra.mxu0 0
  %1753 = vmatprep.subr.bf16.mxu0 0
  %1754 = vmatpush1.bf16.msra.mxu0 0
  %1755 = vmatprep.subr.bf16.mxu0 0
  %1756 = vmatpush1.bf16.msra.mxu0 %v1737
  %1757 = vmatprep.subr.bf16.mxu0 0
  %1758 = vmatpush1.bf16.msra.mxu0 %v1736
  %1759 = vmatprep.subr.bf16.mxu0 0
  %1760 = vmatpush2.bf16.msra.mxu0 0
  %1761 = vmatprep.subr.bf16.mxu0 0
  %1762 = vmatpush2.bf16.msra.mxu0 0
  %1763 = vmatprep.subr.bf16.mxu0 0
  %1764 = vmatpush2.bf16.msra.mxu0 0
  %1765 = vmatprep.subr.bf16.mxu0 0
  %1766 = vmatpush2.bf16.msra.mxu0 0
  %1767 = vmatprep.subr.bf16.mxu0 0
  %1768 = vmatpush2.bf16.msra.mxu0 0
  %1769 = vmatprep.subr.bf16.mxu0 0
  %1770 = vmatpush2.bf16.msra.mxu0 0
  %1771 = vmatprep.subr.bf16.mxu0 0
  %1772 = vmatpush2.bf16.msra.mxu0 0
  %1773 = vmatprep.subr.bf16.mxu0 0
  %1774 = vmatpush2.bf16.msra.mxu0 0
  %1775 = vmatprep.mubr.bf16.mxu0 0
  %1776 = vmatmul.mubr.bf16.gmra.mxu0 %v1741
  %v1777 = vpop.f32.mrf.mxu0
  %v1778 = vadd.f32 %v1726, %v1777
  %v1779 = vpop.f32.mrf.mxu0
  %v1780 = vpop.f32.mrf.mxu0
  %v1781 = vadd.f32 %v1726, %v1780
  %v1782 = vpop.f32.mrf.mxu0
  %1783 = vdwg.mxu0
  %vm1784 = vcmask 64512
  %1785 = vst.msk [vmem:[%s11] sm:$0xff] %vm1784, %v1778
  %1786 = vst.msk [vmem:[%s11 + $0x8] sm:$0xff] %vm1784, %v1781
  // Predicated region
  $region42: #{drnn_bert_forward.1} parent=0 // pred_check
    _
  $region43: #{drnn_bert_forward.1} parent=0 // pred_check_branch
    %1788 = sbr.rel (0) target = $region45
  $region44: #{drnn_bert_forward.1} parent=0 // pred_region
    _
  $region45: #{drnn_bert_forward.1} parent=0 // pred_fallthru
    _
  // Predicated region
  $region46: #{drnn_bert_forward.1} parent=0 // pred_check
    _
  $region47: #{drnn_bert_forward.1} parent=0 // pred_check_branch
    %1790 = sbr.rel (0) target = $region49
  $region48: #{drnn_bert_forward.1} parent=0 // pred_region
    _
  $region49: #{drnn_bert_forward.1} parent=0 // pred_fallthru
    _
  // Predicated region
  $region50: #{drnn_bert_forward.1} parent=0 // pred_check
    _
  $region51: #{drnn_bert_forward.1} parent=0 // pred_check_branch
    %1792 = sbr.rel (0) target = $region53
  $region52: #{drnn_bert_forward.1} parent=0 // pred_region
    _
  $region53: #{drnn_bert_forward.1} parent=0 // pred_fallthru
    _
  // Predicated region
  $region54: #{drnn_bert_forward.1} parent=0 // pred_check
    _
  $region55: #{drnn_bert_forward.1} parent=0 // pred_check_branch
    %1794 = sbr.rel (0) target = $region57
  $region56: #{drnn_bert_forward.1} parent=0 // pred_region
    _
  $region57: #{drnn_bert_forward.1} parent=0 // pred_fallthru
    _

</llo_original>
